<compile_context>
chip_gen: v7x
topology: tpu7x:2x2x1
jax: 0.10.0
libtpu: 0.0.40
codegen_flags: <defaults>
</compile_context>

<pallas_src>
import functools
import math

import jax
import jax.numpy as jnp
from jax.experimental import pallas as pl
from jax.experimental.pallas import tpu as pltpu  # noqa: F401  (CompilerParams needed at real sizes)

# --- small stand-in config for bert-base-cased --------------------------------
VOCAB = 100
MAX_POS = 16
HIDDEN = 32
N_HEADS = 2
HEAD_DIM = HIDDEN // N_HEADS
INTER = 4 * HIDDEN
N_LAYERS = 2
N_CLASSES = 3
LN_EPS = 1e-12
LANE_PAD = 128          # lane-dense width for the classifier output


# --- in-kernel helpers ---------------------------------------------------------
def _layer_norm(x, g, b):
    mu = jnp.mean(x, axis=-1, keepdims=True)
    var = jnp.mean(jnp.square(x - mu), axis=-1, keepdims=True)
    return (x - mu) * jax.lax.rsqrt(var + LN_EPS) * g + b


def _gelu(x):
    # TODO(synk): HF BERT uses exact erf-GELU; tanh approximation used here.
    c = math.sqrt(2.0 / math.pi)
    return 0.5 * x * (1.0 + jnp.tanh(c * (x + 0.044715 * x * x * x)))


def _mm(x, w_bf16, b_f32):
    # bf16 operands on the MXU, f32 accumulation, bias add in f32.
    return jnp.dot(x.astype(jnp.bfloat16), w_bf16,
                   preferred_element_type=jnp.float32) + b_f32


# --- fused forward kernel ------------------------------------------------------
def bert_forward_kernel(batch, seq,
                        emb_ref, bias_ref, gln_ref, bln_ref,
                        wqkv_ref, bqkv_ref, wo_ref, bo_ref,
                        g1_ref, be1_ref, w1_ref, bf1_ref,
                        w2_ref, bf2_ref, g2_ref, be2_ref,
                        wp_ref, bp_ref, wc_ref, bc_ref,
                        logits_ref):
    n_tok = batch * seq

    # Embedding LayerNorm over the whole flattened batch.
    x = _layer_norm(emb_ref[...].astype(jnp.float32), gln_ref[...], bln_ref[...])
    bias = bias_ref[...]                       # (B*S, B*S) additive attention mask (f32)

    lane = jax.lax.broadcasted_iota(jnp.int32, (1, HIDDEN), 1)
    head_masks = [
        ((lane >= h * HEAD_DIM) & (lane < (h + 1) * HEAD_DIM)).astype(jnp.float32)
        for h in range(N_HEADS)
    ]
    scale = 1.0 / math.sqrt(HEAD_DIM)

    for l in range(N_LAYERS):                  # static unroll over layers
        # Fused QKV projection: one (H, 3H) matmul over all B*S rows.
        qkv = _mm(x, wqkv_ref[l], bqkv_ref[l])             # (B*S, 3H) f32
        q = qkv[:, 0 * HIDDEN:1 * HIDDEN]
        k = qkv[:, 1 * HIDDEN:2 * HIDDEN]
        v = qkv[:, 2 * HIDDEN:3 * HIDDEN]

        # Per-head attention via lane masks: (q*hm) @ k.T only contracts the
        # head's lanes; p @ (v*hm) is nonzero only in that head's output lanes,
        # so summing over heads reassembles the concatenated context without
        # any jnp.concatenate or sub-lane slices.
        ctx = jnp.zeros((n_tok, HIDDEN), jnp.float32)
        for hm in head_masks:
            s = jnp.dot(q * hm, k.T, preferred_element_type=jnp.float32) * scale + bias
            s = s - jnp.max(s, axis=-1, keepdims=True)
            p = jnp.exp(s)
            p = p * pl.reciprocal(jnp.sum(p, axis=-1, keepdims=True), approx=True)
            ctx = ctx + jnp.dot(p, v * hm, preferred_element_type=jnp.float32)

        attn = _mm(ctx, wo_ref[l], bo_ref[l])
        x = _layer_norm(x + attn, g1_ref[l], be1_ref[l])

        h1 = _gelu(_mm(x, w1_ref[l], bf1_ref[l]))
        ffn = _mm(h1, w2_ref[l], bf2_ref[l])
        x = _layer_norm(x + ffn, g2_ref[l], be2_ref[l])

    # Pooler + classifier on the [CLS] token of each sequence.
    cls = x.reshape(batch, seq, HIDDEN)[:, 0, :]           # (B, H)
    pooled = jnp.tanh(_mm(cls, wp_ref[...], bp_ref[...]))
    # TODO(synk): nn.Dropout(p=0.3) is identity at inference; no-op here.
    logits_ref[...] = _mm(pooled, wc_ref[...], bc_ref[...]).astype(logits_ref.dtype)


# --- wrapper -------------------------------------------------------------------
def _build_attention_bias(attention_mask):
    """(B*S, B*S) additive mask: 0 for same-sequence non-padded keys, -1e9 else."""
    B, S = attention_mask.shape
    key_ok = attention_mask.astype(jnp.float32).reshape(1, B * S)
    batch_id = jnp.repeat(jnp.arange(B), S)
    same_seq = (batch_id[:, None] == batch_id[None, :]).astype(jnp.float32)
    return (1.0 - same_seq * key_ok) * jnp.float32(-1e9)


def bert_classifier_forward(packed, input_ids, attention_mask):
    B, S = input_ids.shape
    # Embedding lookups are glue (gather) in plain JAX.
    emb = (packed["word_emb"][input_ids]
           + packed["pos_emb"][jnp.arange(S)][None, :, :]
           + packed["type_emb"][jnp.zeros((B, S), jnp.int32)])
    emb_flat = emb.reshape(B * S, HIDDEN)
    bias = _build_attention_bias(attention_mask)

    kernel = functools.partial(bert_forward_kernel, B, S)
    # TODO(synk): at real bert-base sizes (H=768, INTER=3072) add a weight-tiled
    # grid (K-blocked FFN), a batch-parallel grid axis for v7x's 2 TensorCores,
    # and raise vmem_limit_bytes via pltpu.CompilerParams. At these toy sizes a
    # single un-gridded fused call minimizes launch overhead.
    logits_pad = pl.pallas_call(
        kernel,
        out_shape=jax.ShapeDtypeStruct((B, LANE_PAD), jnp.float32),
    )(emb_flat, bias,
      packed["emb_ln_g"], packed["emb_ln_b"],
      packed["wqkv"], packed["bqkv"], packed["wo"], packed["bo"],
      packed["ln1_g"], packed["ln1_b"],
      packed["w1"], packed["b1"], packed["w2"], packed["b2"],
      packed["ln2_g"], packed["ln2_b"],
      packed["pool_w"], packed["pool_b"],
      packed["out_w_pad"], packed["out_b_pad"])
    return logits_pad[:, :N_CLASSES]


# --- deterministic parameter construction & packing ----------------------------
def init_params(key):
    def nrm(k, shape, scale=0.02):
        return (scale * jax.random.normal(k, shape)).astype(jnp.float32)

    keys = iter(jax.random.split(key, 128))
    params = {
        "word_emb": nrm(next(keys), (VOCAB, HIDDEN)),
        "pos_emb":  nrm(next(keys), (MAX_POS, HIDDEN)),
        "type_emb": nrm(next(keys), (2, HIDDEN)),
        "emb_ln_g": jnp.ones((1, HIDDEN), jnp.float32),
        "emb_ln_b": jnp.zeros((1, HIDDEN), jnp.float32),
        "pool_w":   nrm(next(keys), (HIDDEN, HIDDEN)),
        "pool_b":   jnp.zeros((1, HIDDEN), jnp.float32),
        "out_w":    nrm(next(keys), (HIDDEN, N_CLASSES)),
        "out_b":    jnp.zeros((1, N_CLASSES), jnp.float32),
        "layers": [],
    }
    for _ in range(N_LAYERS):
        params["layers"].append({
            "wq": nrm(next(keys), (HIDDEN, HIDDEN)), "bq": jnp.zeros((1, HIDDEN), jnp.float32),
            "wk": nrm(next(keys), (HIDDEN, HIDDEN)), "bk": jnp.zeros((1, HIDDEN), jnp.float32),
            "wv": nrm(next(keys), (HIDDEN, HIDDEN)), "bv": jnp.zeros((1, HIDDEN), jnp.float32),
            "wo": nrm(next(keys), (HIDDEN, HIDDEN)), "bo": jnp.zeros((1, HIDDEN), jnp.float32),
            "ln1_g": jnp.ones((1, HIDDEN), jnp.float32),
            "ln1_b": jnp.zeros((1, HIDDEN), jnp.float32),
            "w1": nrm(next(keys), (HIDDEN, INTER)), "b1": jnp.zeros((1, INTER), jnp.float32),
            "w2": nrm(next(keys), (INTER, HIDDEN)), "b2": jnp.zeros((1, HIDDEN), jnp.float32),
            "ln2_g": jnp.ones((1, HIDDEN), jnp.float32),
            "ln2_b": jnp.zeros((1, HIDDEN), jnp.float32),
        })
    return params


def pack_params(p):
    """Host-side packing: fuse QKV, stack layers, bf16 matmul weights, pad classifier."""
    def bf16(a):
        return a.astype(jnp.bfloat16)

    layers = p["layers"]
    return {
        "word_emb": p["word_emb"], "pos_emb": p["pos_emb"], "type_emb": p["type_emb"],
        "emb_ln_g": p["emb_ln_g"], "emb_ln_b": p["emb_ln_b"],
        "wqkv": bf16(jnp.stack([jnp.concatenate([lp["wq"], lp["wk"], lp["wv"]], axis=1)
                                for lp in layers])),                       # (L, H, 3H)
        "bqkv": jnp.stack([jnp.concatenate([lp["bq"], lp["bk"], lp["bv"]], axis=1)
                           for lp in layers]),                             # (L, 1, 3H)
        "wo": bf16(jnp.stack([lp["wo"] for lp in layers])),
        "bo": jnp.stack([lp["bo"] for lp in layers]),
        "ln1_g": jnp.stack([lp["ln1_g"] for lp in layers]),
        "ln1_b": jnp.stack([lp["ln1_b"] for lp in layers]),
        "w1": bf16(jnp.stack([lp["w1"] for lp in layers])),
        "b1": jnp.stack([lp["b1"] for lp in layers]),
        "w2": bf16(jnp.stack([lp["w2"] for lp in layers])),
        "b2": jnp.stack([lp["b2"] for lp in layers]),
        "ln2_g": jnp.stack([lp["ln2_g"] for lp in layers]),
        "ln2_b": jnp.stack([lp["ln2_b"] for lp in layers]),
        "pool_w": bf16(p["pool_w"]), "pool_b": p["pool_b"],
        "out_w_pad": bf16(jnp.zeros((HIDDEN, LANE_PAD), jnp.float32)
                          .at[:, :N_CLASSES].set(p["out_w"])),
        "out_b_pad": jnp.zeros((1, LANE_PAD), jnp.float32)
                        .at[:, :N_CLASSES].set(p["out_b"]),
    }


if __name__ == "__main__":
    key = jax.random.PRNGKey(0)
    pkey, ikey = jax.random.split(key)
    params = init_params(pkey)
    packed = pack_params(params)

    B, S = 2, 8
    input_ids = jax.random.randint(ikey, (B, S), 0, VOCAB, dtype=jnp.int32)
    attention_mask = jnp.array([[1, 1, 1, 1, 1, 1, 1, 1],
                                [1, 1, 1, 1, 1, 0, 0, 0]], dtype=jnp.int32)

    logits = bert_classifier_forward(packed, input_ids, attention_mask)
    jax.block_until_ready(logits)
    assert logits.shape == (B, N_CLASSES)
    print("KERNEL_OK")
</pallas_src>

<mosaic_0001>
module attributes {stable_mosaic.version = 11 : i64} {
  func.func @bert_forward_kernel(%arg0: memref<16x32xf32, #tpu.memory_space<vmem>>, %arg1: memref<16x16xf32, #tpu.memory_space<vmem>>, %arg2: memref<1x32xf32, #tpu.memory_space<vmem>>, %arg3: memref<1x32xf32, #tpu.memory_space<vmem>>, %arg4: memref<2x32x96xbf16, #tpu.memory_space<vmem>>, %arg5: memref<2x1x96xf32, #tpu.memory_space<vmem>>, %arg6: memref<2x32x32xbf16, #tpu.memory_space<vmem>>, %arg7: memref<2x1x32xf32, #tpu.memory_space<vmem>>, %arg8: memref<2x1x32xf32, #tpu.memory_space<vmem>>, %arg9: memref<2x1x32xf32, #tpu.memory_space<vmem>>, %arg10: memref<2x32x128xbf16, #tpu.memory_space<vmem>>, %arg11: memref<2x1x128xf32, #tpu.memory_space<vmem>>, %arg12: memref<2x128x32xbf16, #tpu.memory_space<vmem>>, %arg13: memref<2x1x32xf32, #tpu.memory_space<vmem>>, %arg14: memref<2x1x32xf32, #tpu.memory_space<vmem>>, %arg15: memref<2x1x32xf32, #tpu.memory_space<vmem>>, %arg16: memref<32x32xbf16, #tpu.memory_space<vmem>>, %arg17: memref<1x32xf32, #tpu.memory_space<vmem>>, %arg18: memref<32x128xbf16, #tpu.memory_space<vmem>>, %arg19: memref<1x128xf32, #tpu.memory_space<vmem>>, %arg20: memref<2x128xf32, #tpu.memory_space<vmem>>) attributes {dimension_semantics = [], scalar_prefetch = 0 : i64, scratch_operands = 0 : i64, tpu.core_type = #tpu.core_type<tc>} {
    %c0 = arith.constant 0 : index
    %c0_0 = arith.constant 0 : index
    %0 = vector.load %arg0[%c0, %c0_0] : memref<16x32xf32, #tpu.memory_space<vmem>>, vector<16x32xf32>
    %c0_1 = arith.constant 0 : index
    %c0_2 = arith.constant 0 : index
    %1 = vector.load %arg2[%c0_1, %c0_2] : memref<1x32xf32, #tpu.memory_space<vmem>>, vector<1x32xf32>
    %c0_3 = arith.constant 0 : index
    %c0_4 = arith.constant 0 : index
    %2 = vector.load %arg3[%c0_3, %c0_4] : memref<1x32xf32, #tpu.memory_space<vmem>>, vector<1x32xf32>
    %cst = arith.constant dense<0.000000e+00> : vector<16xf32>
    %3 = vector.multi_reduction <add>, %0, %cst [1] : vector<16x32xf32> to vector<16xf32>
    %4 = vector.shape_cast %3 : vector<16xf32> to vector<16x1xf32>
    %cst_5 = arith.constant 3.200000e+01 : f32
    %5 = vector.broadcast %cst_5 : f32 to vector<16x1xf32>
    %6 = arith.divf %4, %5 : vector<16x1xf32>
    %7 = vector.broadcast %6 : vector<16x1xf32> to vector<16x32xf32>
    %8 = arith.subf %0, %7 : vector<16x32xf32>
    %9 = arith.mulf %8, %8 : vector<16x32xf32>
    %cst_6 = arith.constant dense<0.000000e+00> : vector<16xf32>
    %10 = vector.multi_reduction <add>, %9, %cst_6 [1] : vector<16x32xf32> to vector<16xf32>
    %11 = vector.shape_cast %10 : vector<16xf32> to vector<16x1xf32>
    %cst_7 = arith.constant 3.200000e+01 : f32
    %12 = vector.broadcast %cst_7 : f32 to vector<16x1xf32>
    %13 = arith.divf %11, %12 : vector<16x1xf32>
    %14 = vector.broadcast %6 : vector<16x1xf32> to vector<16x32xf32>
    %15 = arith.subf %0, %14 : vector<16x32xf32>
    %cst_8 = arith.constant 9.99999996E-13 : f32
    %16 = vector.broadcast %cst_8 : f32 to vector<16x1xf32>
    %17 = arith.addf %13, %16 : vector<16x1xf32>
    %18 = math.rsqrt %17 : vector<16x1xf32>
    %19 = vector.broadcast %18 : vector<16x1xf32> to vector<16x32xf32>
    %20 = arith.mulf %15, %19 : vector<16x32xf32>
    %21 = vector.broadcast %1 : vector<1x32xf32> to vector<16x32xf32>
    %22 = arith.mulf %20, %21 : vector<16x32xf32>
    %23 = vector.broadcast %2 : vector<1x32xf32> to vector<16x32xf32>
    %24 = arith.addf %22, %23 : vector<16x32xf32>
    %c0_9 = arith.constant 0 : index
    %c0_10 = arith.constant 0 : index
    %25 = vector.load %arg1[%c0_9, %c0_10] : memref<16x16xf32, #tpu.memory_space<vmem>>, vector<16x16xf32>
    %26 = tpu.iota {dimensions = array<i32: 1>} : vector<1x32xi32>
    %c0_i32 = arith.constant 0 : i32
    %27 = vector.broadcast %c0_i32 : i32 to vector<1x32xi32>
    %28 = arith.cmpi sge, %26, %27 : vector<1x32xi32>
    %c16_i32 = arith.constant 16 : i32
    %29 = vector.broadcast %c16_i32 : i32 to vector<1x32xi32>
    %30 = arith.cmpi slt, %26, %29 : vector<1x32xi32>
    %31 = arith.andi %28, %30 : vector<1x32xi1>
    %32 = arith.extui %31 : vector<1x32xi1> to vector<1x32xi32>
    %33 = arith.sitofp %32 : vector<1x32xi32> to vector<1x32xf32>
    %c16_i32_11 = arith.constant 16 : i32
    %34 = vector.broadcast %c16_i32_11 : i32 to vector<1x32xi32>
    %35 = arith.cmpi sge, %26, %34 : vector<1x32xi32>
    %c32_i32 = arith.constant 32 : i32
    %36 = vector.broadcast %c32_i32 : i32 to vector<1x32xi32>
    %37 = arith.cmpi slt, %26, %36 : vector<1x32xi32>
    %38 = arith.andi %35, %37 : vector<1x32xi1>
    %39 = arith.extui %38 : vector<1x32xi1> to vector<1x32xi32>
    %40 = arith.sitofp %39 : vector<1x32xi32> to vector<1x32xf32>
    %c0_12 = arith.constant 0 : index
    %c0_13 = arith.constant 0 : index
    %c0_14 = arith.constant 0 : index
    %41 = vector.load %arg4[%c0_12, %c0_13, %c0_14] : memref<2x32x96xbf16, #tpu.memory_space<vmem>>, vector<1x32x96xbf16>
    %42 = vector.shape_cast %41 : vector<1x32x96xbf16> to vector<32x96xbf16>
    %c0_15 = arith.constant 0 : index
    %c0_16 = arith.constant 0 : index
    %c0_17 = arith.constant 0 : index
    %43 = vector.load %arg5[%c0_15, %c0_16, %c0_17] : memref<2x1x96xf32, #tpu.memory_space<vmem>>, vector<1x1x96xf32>
    %44 = vector.shape_cast %43 : vector<1x1x96xf32> to vector<1x96xf32>
    %45 = arith.truncf %24 : vector<16x32xf32> to vector<16x32xbf16>
    %cst_18 = arith.constant dense<0.000000e+00> : vector<16x96xf32>
    %46 = tpu.matmul %45, %42, %cst_18 {dimension_numbers = #tpu.dot_dimension_numbers<[1], [0], [0], [1], [0, 0, 1, 1], [], []>} : vector<16x32xbf16>, vector<32x96xbf16>, vector<16x96xf32> -> vector<16x96xf32>
    %47 = vector.broadcast %44 : vector<1x96xf32> to vector<16x96xf32>
    %48 = arith.addf %46, %47 : vector<16x96xf32>
    %49 = vector.extract_strided_slice %48 {offsets = [0, 0], sizes = [16, 32], strides = [1, 1]} : vector<16x96xf32> to vector<16x32xf32>
    %50 = vector.extract_strided_slice %48 {offsets = [0, 32], sizes = [16, 32], strides = [1, 1]} : vector<16x96xf32> to vector<16x32xf32>
    %51 = vector.extract_strided_slice %48 {offsets = [0, 64], sizes = [16, 32], strides = [1, 1]} : vector<16x96xf32> to vector<16x32xf32>
    %cst_19 = arith.constant 0.000000e+00 : f32
    %52 = vector.broadcast %cst_19 : f32 to vector<16x32xf32>
    %53 = vector.broadcast %33 : vector<1x32xf32> to vector<16x32xf32>
    %54 = arith.mulf %49, %53 : vector<16x32xf32>
    %55 = tpu.transpose %50, [1, 0] : vector<16x32xf32> -> vector<32x16xf32>
    %cst_20 = arith.constant dense<0.000000e+00> : vector<16x16xf32>
    %56 = tpu.matmul %54, %55, %cst_20 {dimension_numbers = #tpu.dot_dimension_numbers<[1], [0], [0], [1], [0, 0, 1, 1], [], []>} : vector<16x32xf32>, vector<32x16xf32>, vector<16x16xf32> -> vector<16x16xf32>
    %cst_21 = arith.constant 2.500000e-01 : f32
    %57 = vector.broadcast %cst_21 : f32 to vector<16x16xf32>
    %58 = arith.mulf %56, %57 : vector<16x16xf32>
    %59 = arith.addf %58, %25 : vector<16x16xf32>
    %cst_22 = arith.constant dense<0xFF800000> : vector<16xf32>
    %60 = vector.multi_reduction <maximumf>, %59, %cst_22 [1] : vector<16x16xf32> to vector<16xf32>
    %61 = vector.shape_cast %60 : vector<16xf32> to vector<16x1xf32>
    %62 = vector.broadcast %61 : vector<16x1xf32> to vector<16x16xf32>
    %63 = arith.subf %59, %62 : vector<16x16xf32>
    %64 = math.exp %63 : vector<16x16xf32>
    %cst_23 = arith.constant dense<0.000000e+00> : vector<16xf32>
    %65 = vector.multi_reduction <add>, %64, %cst_23 [1] : vector<16x16xf32> to vector<16xf32>
    %66 = vector.shape_cast %65 : vector<16xf32> to vector<16x1xf32>
    %67 = tpu.reciprocal %66 {approx = true} : vector<16x1xf32> -> vector<16x1xf32>
    %68 = vector.broadcast %67 : vector<16x1xf32> to vector<16x16xf32>
    %69 = arith.mulf %64, %68 : vector<16x16xf32>
    %70 = vector.broadcast %33 : vector<1x32xf32> to vector<16x32xf32>
    %71 = arith.mulf %51, %70 : vector<16x32xf32>
    %cst_24 = arith.constant dense<0.000000e+00> : vector<16x32xf32>
    %72 = tpu.matmul %69, %71, %cst_24 {dimension_numbers = #tpu.dot_dimension_numbers<[1], [0], [0], [1], [0, 0, 1, 1], [], []>} : vector<16x16xf32>, vector<16x32xf32>, vector<16x32xf32> -> vector<16x32xf32>
    %73 = arith.addf %52, %72 : vector<16x32xf32>
    %74 = vector.broadcast %40 : vector<1x32xf32> to vector<16x32xf32>
    %75 = arith.mulf %49, %74 : vector<16x32xf32>
    %76 = tpu.transpose %50, [1, 0] : vector<16x32xf32> -> vector<32x16xf32>
    %cst_25 = arith.constant dense<0.000000e+00> : vector<16x16xf32>
    %77 = tpu.matmul %75, %76, %cst_25 {dimension_numbers = #tpu.dot_dimension_numbers<[1], [0], [0], [1], [0, 0, 1, 1], [], []>} : vector<16x32xf32>, vector<32x16xf32>, vector<16x16xf32> -> vector<16x16xf32>
    %cst_26 = arith.constant 2.500000e-01 : f32
    %78 = vector.broadcast %cst_26 : f32 to vector<16x16xf32>
    %79 = arith.mulf %77, %78 : vector<16x16xf32>
    %80 = arith.addf %79, %25 : vector<16x16xf32>
    %cst_27 = arith.constant dense<0xFF800000> : vector<16xf32>
    %81 = vector.multi_reduction <maximumf>, %80, %cst_27 [1] : vector<16x16xf32> to vector<16xf32>
    %82 = vector.shape_cast %81 : vector<16xf32> to vector<16x1xf32>
    %83 = vector.broadcast %82 : vector<16x1xf32> to vector<16x16xf32>
    %84 = arith.subf %80, %83 : vector<16x16xf32>
    %85 = math.exp %84 : vector<16x16xf32>
    %cst_28 = arith.constant dense<0.000000e+00> : vector<16xf32>
    %86 = vector.multi_reduction <add>, %85, %cst_28 [1] : vector<16x16xf32> to vector<16xf32>
    %87 = vector.shape_cast %86 : vector<16xf32> to vector<16x1xf32>
    %88 = tpu.reciprocal %87 {approx = true} : vector<16x1xf32> -> vector<16x1xf32>
    %89 = vector.broadcast %88 : vector<16x1xf32> to vector<16x16xf32>
    %90 = arith.mulf %85, %89 : vector<16x16xf32>
    %91 = vector.broadcast %40 : vector<1x32xf32> to vector<16x32xf32>
    %92 = arith.mulf %51, %91 : vector<16x32xf32>
    %cst_29 = arith.constant dense<0.000000e+00> : vector<16x32xf32>
    %93 = tpu.matmul %90, %92, %cst_29 {dimension_numbers = #tpu.dot_dimension_numbers<[1], [0], [0], [1], [0, 0, 1, 1], [], []>} : vector<16x16xf32>, vector<16x32xf32>, vector<16x32xf32> -> vector<16x32xf32>
    %94 = arith.addf %73, %93 : vector<16x32xf32>
    %c0_30 = arith.constant 0 : index
    %c0_31 = arith.constant 0 : index
    %c0_32 = arith.constant 0 : index
    %95 = vector.load %arg6[%c0_30, %c0_31, %c0_32] : memref<2x32x32xbf16, #tpu.memory_space<vmem>>, vector<1x32x32xbf16>
    %96 = vector.shape_cast %95 : vector<1x32x32xbf16> to vector<32x32xbf16>
    %c0_33 = arith.constant 0 : index
    %c0_34 = arith.constant 0 : index
    %c0_35 = arith.constant 0 : index
    %97 = vector.load %arg7[%c0_33, %c0_34, %c0_35] : memref<2x1x32xf32, #tpu.memory_space<vmem>>, vector<1x1x32xf32>
    %98 = vector.shape_cast %97 : vector<1x1x32xf32> to vector<1x32xf32>
    %99 = arith.truncf %94 : vector<16x32xf32> to vector<16x32xbf16>
    %cst_36 = arith.constant dense<0.000000e+00> : vector<16x32xf32>
    %100 = tpu.matmul %99, %96, %cst_36 {dimension_numbers = #tpu.dot_dimension_numbers<[1], [0], [0], [1], [0, 0, 1, 1], [], []>} : vector<16x32xbf16>, vector<32x32xbf16>, vector<16x32xf32> -> vector<16x32xf32>
    %101 = vector.broadcast %98 : vector<1x32xf32> to vector<16x32xf32>
    %102 = arith.addf %100, %101 : vector<16x32xf32>
    %103 = arith.addf %24, %102 : vector<16x32xf32>
    %c0_37 = arith.constant 0 : index
    %c0_38 = arith.constant 0 : index
    %c0_39 = arith.constant 0 : index
    %104 = vector.load %arg8[%c0_37, %c0_38, %c0_39] : memref<2x1x32xf32, #tpu.memory_space<vmem>>, vector<1x1x32xf32>
    %105 = vector.shape_cast %104 : vector<1x1x32xf32> to vector<1x32xf32>
    %c0_40 = arith.constant 0 : index
    %c0_41 = arith.constant 0 : index
    %c0_42 = arith.constant 0 : index
    %106 = vector.load %arg9[%c0_40, %c0_41, %c0_42] : memref<2x1x32xf32, #tpu.memory_space<vmem>>, vector<1x1x32xf32>
    %107 = vector.shape_cast %106 : vector<1x1x32xf32> to vector<1x32xf32>
    %cst_43 = arith.constant dense<0.000000e+00> : vector<16xf32>
    %108 = vector.multi_reduction <add>, %103, %cst_43 [1] : vector<16x32xf32> to vector<16xf32>
    %109 = vector.shape_cast %108 : vector<16xf32> to vector<16x1xf32>
    %cst_44 = arith.constant 3.200000e+01 : f32
    %110 = vector.broadcast %cst_44 : f32 to vector<16x1xf32>
    %111 = arith.divf %109, %110 : vector<16x1xf32>
    %112 = vector.broadcast %111 : vector<16x1xf32> to vector<16x32xf32>
    %113 = arith.subf %103, %112 : vector<16x32xf32>
    %114 = arith.mulf %113, %113 : vector<16x32xf32>
    %cst_45 = arith.constant dense<0.000000e+00> : vector<16xf32>
    %115 = vector.multi_reduction <add>, %114, %cst_45 [1] : vector<16x32xf32> to vector<16xf32>
    %116 = vector.shape_cast %115 : vector<16xf32> to vector<16x1xf32>
    %cst_46 = arith.constant 3.200000e+01 : f32
    %117 = vector.broadcast %cst_46 : f32 to vector<16x1xf32>
    %118 = arith.divf %116, %117 : vector<16x1xf32>
    %119 = vector.broadcast %111 : vector<16x1xf32> to vector<16x32xf32>
    %120 = arith.subf %103, %119 : vector<16x32xf32>
    %cst_47 = arith.constant 9.99999996E-13 : f32
    %121 = vector.broadcast %cst_47 : f32 to vector<16x1xf32>
    %122 = arith.addf %118, %121 : vector<16x1xf32>
    %123 = math.rsqrt %122 : vector<16x1xf32>
    %124 = vector.broadcast %123 : vector<16x1xf32> to vector<16x32xf32>
    %125 = arith.mulf %120, %124 : vector<16x32xf32>
    %126 = vector.broadcast %105 : vector<1x32xf32> to vector<16x32xf32>
    %127 = arith.mulf %125, %126 : vector<16x32xf32>
    %128 = vector.broadcast %107 : vector<1x32xf32> to vector<16x32xf32>
    %129 = arith.addf %127, %128 : vector<16x32xf32>
    %c0_48 = arith.constant 0 : index
    %c0_49 = arith.constant 0 : index
    %c0_50 = arith.constant 0 : index
    %130 = vector.load %arg10[%c0_48, %c0_49, %c0_50] : memref<2x32x128xbf16, #tpu.memory_space<vmem>>, vector<1x32x128xbf16>
    %131 = vector.shape_cast %130 : vector<1x32x128xbf16> to vector<32x128xbf16>
    %c0_51 = arith.constant 0 : index
    %c0_52 = arith.constant 0 : index
    %c0_53 = arith.constant 0 : index
    %132 = vector.load %arg11[%c0_51, %c0_52, %c0_53] : memref<2x1x128xf32, #tpu.memory_space<vmem>>, vector<1x1x128xf32>
    %133 = vector.shape_cast %132 : vector<1x1x128xf32> to vector<1x128xf32>
    %134 = arith.truncf %129 : vector<16x32xf32> to vector<16x32xbf16>
    %cst_54 = arith.constant dense<0.000000e+00> : vector<16x128xf32>
    %135 = tpu.matmul %134, %131, %cst_54 {dimension_numbers = #tpu.dot_dimension_numbers<[1], [0], [0], [1], [0, 0, 1, 1], [], []>} : vector<16x32xbf16>, vector<32x128xbf16>, vector<16x128xf32> -> vector<16x128xf32>
    %136 = vector.broadcast %133 : vector<1x128xf32> to vector<16x128xf32>
    %137 = arith.addf %135, %136 : vector<16x128xf32>
    %cst_55 = arith.constant 5.000000e-01 : f32
    %138 = vector.broadcast %cst_55 : f32 to vector<16x128xf32>
    %139 = arith.mulf %138, %137 : vector<16x128xf32>
    %cst_56 = arith.constant 4.471500e-02 : f32
    %140 = vector.broadcast %cst_56 : f32 to vector<16x128xf32>
    %141 = arith.mulf %140, %137 : vector<16x128xf32>
    %142 = arith.mulf %141, %137 : vector<16x128xf32>
    %143 = arith.mulf %142, %137 : vector<16x128xf32>
    %144 = arith.addf %137, %143 : vector<16x128xf32>
    %cst_57 = arith.constant 0.797884583 : f32
    %145 = vector.broadcast %cst_57 : f32 to vector<16x128xf32>
    %146 = arith.mulf %145, %144 : vector<16x128xf32>
    %147 = math.tanh %146 : vector<16x128xf32>
    %cst_58 = arith.constant 1.000000e+00 : f32
    %148 = vector.broadcast %cst_58 : f32 to vector<16x128xf32>
    %149 = arith.addf %148, %147 : vector<16x128xf32>
    %150 = arith.mulf %139, %149 : vector<16x128xf32>
    %c0_59 = arith.constant 0 : index
    %c0_60 = arith.constant 0 : index
    %c0_61 = arith.constant 0 : index
    %151 = vector.load %arg12[%c0_59, %c0_60, %c0_61] : memref<2x128x32xbf16, #tpu.memory_space<vmem>>, vector<1x128x32xbf16>
    %152 = vector.shape_cast %151 : vector<1x128x32xbf16> to vector<128x32xbf16>
    %c0_62 = arith.constant 0 : index
    %c0_63 = arith.constant 0 : index
    %c0_64 = arith.constant 0 : index
    %153 = vector.load %arg13[%c0_62, %c0_63, %c0_64] : memref<2x1x32xf32, #tpu.memory_space<vmem>>, vector<1x1x32xf32>
    %154 = vector.shape_cast %153 : vector<1x1x32xf32> to vector<1x32xf32>
    %155 = arith.truncf %150 : vector<16x128xf32> to vector<16x128xbf16>
    %cst_65 = arith.constant dense<0.000000e+00> : vector<16x32xf32>
    %156 = tpu.matmul %155, %152, %cst_65 {dimension_numbers = #tpu.dot_dimension_numbers<[1], [0], [0], [1], [0, 0, 1, 1], [], []>} : vector<16x128xbf16>, vector<128x32xbf16>, vector<16x32xf32> -> vector<16x32xf32>
    %157 = vector.broadcast %154 : vector<1x32xf32> to vector<16x32xf32>
    %158 = arith.addf %156, %157 : vector<16x32xf32>
    %159 = arith.addf %129, %158 : vector<16x32xf32>
    %c0_66 = arith.constant 0 : index
    %c0_67 = arith.constant 0 : index
    %c0_68 = arith.constant 0 : index
    %160 = vector.load %arg14[%c0_66, %c0_67, %c0_68] : memref<2x1x32xf32, #tpu.memory_space<vmem>>, vector<1x1x32xf32>
    %161 = vector.shape_cast %160 : vector<1x1x32xf32> to vector<1x32xf32>
    %c0_69 = arith.constant 0 : index
    %c0_70 = arith.constant 0 : index
    %c0_71 = arith.constant 0 : index
    %162 = vector.load %arg15[%c0_69, %c0_70, %c0_71] : memref<2x1x32xf32, #tpu.memory_space<vmem>>, vector<1x1x32xf32>
    %163 = vector.shape_cast %162 : vector<1x1x32xf32> to vector<1x32xf32>
    %cst_72 = arith.constant dense<0.000000e+00> : vector<16xf32>
    %164 = vector.multi_reduction <add>, %159, %cst_72 [1] : vector<16x32xf32> to vector<16xf32>
    %165 = vector.shape_cast %164 : vector<16xf32> to vector<16x1xf32>
    %cst_73 = arith.constant 3.200000e+01 : f32
    %166 = vector.broadcast %cst_73 : f32 to vector<16x1xf32>
    %167 = arith.divf %165, %166 : vector<16x1xf32>
    %168 = vector.broadcast %167 : vector<16x1xf32> to vector<16x32xf32>
    %169 = arith.subf %159, %168 : vector<16x32xf32>
    %170 = arith.mulf %169, %169 : vector<16x32xf32>
    %cst_74 = arith.constant dense<0.000000e+00> : vector<16xf32>
    %171 = vector.multi_reduction <add>, %170, %cst_74 [1] : vector<16x32xf32> to vector<16xf32>
    %172 = vector.shape_cast %171 : vector<16xf32> to vector<16x1xf32>
    %cst_75 = arith.constant 3.200000e+01 : f32
    %173 = vector.broadcast %cst_75 : f32 to vector<16x1xf32>
    %174 = arith.divf %172, %173 : vector<16x1xf32>
    %175 = vector.broadcast %167 : vector<16x1xf32> to vector<16x32xf32>
    %176 = arith.subf %159, %175 : vector<16x32xf32>
    %cst_76 = arith.constant 9.99999996E-13 : f32
    %177 = vector.broadcast %cst_76 : f32 to vector<16x1xf32>
    %178 = arith.addf %174, %177 : vector<16x1xf32>
    %179 = math.rsqrt %178 : vector<16x1xf32>
    %180 = vector.broadcast %179 : vector<16x1xf32> to vector<16x32xf32>
    %181 = arith.mulf %176, %180 : vector<16x32xf32>
    %182 = vector.broadcast %161 : vector<1x32xf32> to vector<16x32xf32>
    %183 = arith.mulf %181, %182 : vector<16x32xf32>
    %184 = vector.broadcast %163 : vector<1x32xf32> to vector<16x32xf32>
    %185 = arith.addf %183, %184 : vector<16x32xf32>
    %c1 = arith.constant 1 : index
    %c0_77 = arith.constant 0 : index
    %c0_78 = arith.constant 0 : index
    %186 = vector.load %arg4[%c1, %c0_77, %c0_78] : memref<2x32x96xbf16, #tpu.memory_space<vmem>>, vector<1x32x96xbf16>
    %187 = vector.shape_cast %186 : vector<1x32x96xbf16> to vector<32x96xbf16>
    %c1_79 = arith.constant 1 : index
    %c0_80 = arith.constant 0 : index
    %c0_81 = arith.constant 0 : index
    %188 = vector.load %arg5[%c1_79, %c0_80, %c0_81] : memref<2x1x96xf32, #tpu.memory_space<vmem>>, vector<1x1x96xf32>
    %189 = vector.shape_cast %188 : vector<1x1x96xf32> to vector<1x96xf32>
    %190 = arith.truncf %185 : vector<16x32xf32> to vector<16x32xbf16>
    %cst_82 = arith.constant dense<0.000000e+00> : vector<16x96xf32>
    %191 = tpu.matmul %190, %187, %cst_82 {dimension_numbers = #tpu.dot_dimension_numbers<[1], [0], [0], [1], [0, 0, 1, 1], [], []>} : vector<16x32xbf16>, vector<32x96xbf16>, vector<16x96xf32> -> vector<16x96xf32>
    %192 = vector.broadcast %189 : vector<1x96xf32> to vector<16x96xf32>
    %193 = arith.addf %191, %192 : vector<16x96xf32>
    %194 = vector.extract_strided_slice %193 {offsets = [0, 0], sizes = [16, 32], strides = [1, 1]} : vector<16x96xf32> to vector<16x32xf32>
    %195 = vector.extract_strided_slice %193 {offsets = [0, 32], sizes = [16, 32], strides = [1, 1]} : vector<16x96xf32> to vector<16x32xf32>
    %196 = vector.extract_strided_slice %193 {offsets = [0, 64], sizes = [16, 32], strides = [1, 1]} : vector<16x96xf32> to vector<16x32xf32>
    %cst_83 = arith.constant 0.000000e+00 : f32
    %197 = vector.broadcast %cst_83 : f32 to vector<16x32xf32>
    %198 = vector.broadcast %33 : vector<1x32xf32> to vector<16x32xf32>
    %199 = arith.mulf %194, %198 : vector<16x32xf32>
    %200 = tpu.transpose %195, [1, 0] : vector<16x32xf32> -> vector<32x16xf32>
    %cst_84 = arith.constant dense<0.000000e+00> : vector<16x16xf32>
    %201 = tpu.matmul %199, %200, %cst_84 {dimension_numbers = #tpu.dot_dimension_numbers<[1], [0], [0], [1], [0, 0, 1, 1], [], []>} : vector<16x32xf32>, vector<32x16xf32>, vector<16x16xf32> -> vector<16x16xf32>
    %cst_85 = arith.constant 2.500000e-01 : f32
    %202 = vector.broadcast %cst_85 : f32 to vector<16x16xf32>
    %203 = arith.mulf %201, %202 : vector<16x16xf32>
    %204 = arith.addf %203, %25 : vector<16x16xf32>
    %cst_86 = arith.constant dense<0xFF800000> : vector<16xf32>
    %205 = vector.multi_reduction <maximumf>, %204, %cst_86 [1] : vector<16x16xf32> to vector<16xf32>
    %206 = vector.shape_cast %205 : vector<16xf32> to vector<16x1xf32>
    %207 = vector.broadcast %206 : vector<16x1xf32> to vector<16x16xf32>
    %208 = arith.subf %204, %207 : vector<16x16xf32>
    %209 = math.exp %208 : vector<16x16xf32>
    %cst_87 = arith.constant dense<0.000000e+00> : vector<16xf32>
    %210 = vector.multi_reduction <add>, %209, %cst_87 [1] : vector<16x16xf32> to vector<16xf32>
    %211 = vector.shape_cast %210 : vector<16xf32> to vector<16x1xf32>
    %212 = tpu.reciprocal %211 {approx = true} : vector<16x1xf32> -> vector<16x1xf32>
    %213 = vector.broadcast %212 : vector<16x1xf32> to vector<16x16xf32>
    %214 = arith.mulf %209, %213 : vector<16x16xf32>
    %215 = vector.broadcast %33 : vector<1x32xf32> to vector<16x32xf32>
    %216 = arith.mulf %196, %215 : vector<16x32xf32>
    %cst_88 = arith.constant dense<0.000000e+00> : vector<16x32xf32>
    %217 = tpu.matmul %214, %216, %cst_88 {dimension_numbers = #tpu.dot_dimension_numbers<[1], [0], [0], [1], [0, 0, 1, 1], [], []>} : vector<16x16xf32>, vector<16x32xf32>, vector<16x32xf32> -> vector<16x32xf32>
    %218 = arith.addf %197, %217 : vector<16x32xf32>
    %219 = vector.broadcast %40 : vector<1x32xf32> to vector<16x32xf32>
    %220 = arith.mulf %194, %219 : vector<16x32xf32>
    %221 = tpu.transpose %195, [1, 0] : vector<16x32xf32> -> vector<32x16xf32>
    %cst_89 = arith.constant dense<0.000000e+00> : vector<16x16xf32>
    %222 = tpu.matmul %220, %221, %cst_89 {dimension_numbers = #tpu.dot_dimension_numbers<[1], [0], [0], [1], [0, 0, 1, 1], [], []>} : vector<16x32xf32>, vector<32x16xf32>, vector<16x16xf32> -> vector<16x16xf32>
    %cst_90 = arith.constant 2.500000e-01 : f32
    %223 = vector.broadcast %cst_90 : f32 to vector<16x16xf32>
    %224 = arith.mulf %222, %223 : vector<16x16xf32>
    %225 = arith.addf %224, %25 : vector<16x16xf32>
    %cst_91 = arith.constant dense<0xFF800000> : vector<16xf32>
    %226 = vector.multi_reduction <maximumf>, %225, %cst_91 [1] : vector<16x16xf32> to vector<16xf32>
    %227 = vector.shape_cast %226 : vector<16xf32> to vector<16x1xf32>
    %228 = vector.broadcast %227 : vector<16x1xf32> to vector<16x16xf32>
    %229 = arith.subf %225, %228 : vector<16x16xf32>
    %230 = math.exp %229 : vector<16x16xf32>
    %cst_92 = arith.constant dense<0.000000e+00> : vector<16xf32>
    %231 = vector.multi_reduction <add>, %230, %cst_92 [1] : vector<16x16xf32> to vector<16xf32>
    %232 = vector.shape_cast %231 : vector<16xf32> to vector<16x1xf32>
    %233 = tpu.reciprocal %232 {approx = true} : vector<16x1xf32> -> vector<16x1xf32>
    %234 = vector.broadcast %233 : vector<16x1xf32> to vector<16x16xf32>
    %235 = arith.mulf %230, %234 : vector<16x16xf32>
    %236 = vector.broadcast %40 : vector<1x32xf32> to vector<16x32xf32>
    %237 = arith.mulf %196, %236 : vector<16x32xf32>
    %cst_93 = arith.constant dense<0.000000e+00> : vector<16x32xf32>
    %238 = tpu.matmul %235, %237, %cst_93 {dimension_numbers = #tpu.dot_dimension_numbers<[1], [0], [0], [1], [0, 0, 1, 1], [], []>} : vector<16x16xf32>, vector<16x32xf32>, vector<16x32xf32> -> vector<16x32xf32>
    %239 = arith.addf %218, %238 : vector<16x32xf32>
    %c1_94 = arith.constant 1 : index
    %c0_95 = arith.constant 0 : index
    %c0_96 = arith.constant 0 : index
    %240 = vector.load %arg6[%c1_94, %c0_95, %c0_96] : memref<2x32x32xbf16, #tpu.memory_space<vmem>>, vector<1x32x32xbf16>
    %241 = vector.shape_cast %240 : vector<1x32x32xbf16> to vector<32x32xbf16>
    %c1_97 = arith.constant 1 : index
    %c0_98 = arith.constant 0 : index
    %c0_99 = arith.constant 0 : index
    %242 = vector.load %arg7[%c1_97, %c0_98, %c0_99] : memref<2x1x32xf32, #tpu.memory_space<vmem>>, vector<1x1x32xf32>
    %243 = vector.shape_cast %242 : vector<1x1x32xf32> to vector<1x32xf32>
    %244 = arith.truncf %239 : vector<16x32xf32> to vector<16x32xbf16>
    %cst_100 = arith.constant dense<0.000000e+00> : vector<16x32xf32>
    %245 = tpu.matmul %244, %241, %cst_100 {dimension_numbers = #tpu.dot_dimension_numbers<[1], [0], [0], [1], [0, 0, 1, 1], [], []>} : vector<16x32xbf16>, vector<32x32xbf16>, vector<16x32xf32> -> vector<16x32xf32>
    %246 = vector.broadcast %243 : vector<1x32xf32> to vector<16x32xf32>
    %247 = arith.addf %245, %246 : vector<16x32xf32>
    %248 = arith.addf %185, %247 : vector<16x32xf32>
    %c1_101 = arith.constant 1 : index
    %c0_102 = arith.constant 0 : index
    %c0_103 = arith.constant 0 : index
    %249 = vector.load %arg8[%c1_101, %c0_102, %c0_103] : memref<2x1x32xf32, #tpu.memory_space<vmem>>, vector<1x1x32xf32>
    %250 = vector.shape_cast %249 : vector<1x1x32xf32> to vector<1x32xf32>
    %c1_104 = arith.constant 1 : index
    %c0_105 = arith.constant 0 : index
    %c0_106 = arith.constant 0 : index
    %251 = vector.load %arg9[%c1_104, %c0_105, %c0_106] : memref<2x1x32xf32, #tpu.memory_space<vmem>>, vector<1x1x32xf32>
    %252 = vector.shape_cast %251 : vector<1x1x32xf32> to vector<1x32xf32>
    %cst_107 = arith.constant dense<0.000000e+00> : vector<16xf32>
    %253 = vector.multi_reduction <add>, %248, %cst_107 [1] : vector<16x32xf32> to vector<16xf32>
    %254 = vector.shape_cast %253 : vector<16xf32> to vector<16x1xf32>
    %cst_108 = arith.constant 3.200000e+01 : f32
    %255 = vector.broadcast %cst_108 : f32 to vector<16x1xf32>
    %256 = arith.divf %254, %255 : vector<16x1xf32>
    %257 = vector.broadcast %256 : vector<16x1xf32> to vector<16x32xf32>
    %258 = arith.subf %248, %257 : vector<16x32xf32>
    %259 = arith.mulf %258, %258 : vector<16x32xf32>
    %cst_109 = arith.constant dense<0.000000e+00> : vector<16xf32>
    %260 = vector.multi_reduction <add>, %259, %cst_109 [1] : vector<16x32xf32> to vector<16xf32>
    %261 = vector.shape_cast %260 : vector<16xf32> to vector<16x1xf32>
    %cst_110 = arith.constant 3.200000e+01 : f32
    %262 = vector.broadcast %cst_110 : f32 to vector<16x1xf32>
    %263 = arith.divf %261, %262 : vector<16x1xf32>
    %264 = vector.broadcast %256 : vector<16x1xf32> to vector<16x32xf32>
    %265 = arith.subf %248, %264 : vector<16x32xf32>
    %cst_111 = arith.constant 9.99999996E-13 : f32
    %266 = vector.broadcast %cst_111 : f32 to vector<16x1xf32>
    %267 = arith.addf %263, %266 : vector<16x1xf32>
    %268 = math.rsqrt %267 : vector<16x1xf32>
    %269 = vector.broadcast %268 : vector<16x1xf32> to vector<16x32xf32>
    %270 = arith.mulf %265, %269 : vector<16x32xf32>
    %271 = vector.broadcast %250 : vector<1x32xf32> to vector<16x32xf32>
    %272 = arith.mulf %270, %271 : vector<16x32xf32>
    %273 = vector.broadcast %252 : vector<1x32xf32> to vector<16x32xf32>
    %274 = arith.addf %272, %273 : vector<16x32xf32>
    %c1_112 = arith.constant 1 : index
    %c0_113 = arith.constant 0 : index
    %c0_114 = arith.constant 0 : index
    %275 = vector.load %arg10[%c1_112, %c0_113, %c0_114] : memref<2x32x128xbf16, #tpu.memory_space<vmem>>, vector<1x32x128xbf16>
    %276 = vector.shape_cast %275 : vector<1x32x128xbf16> to vector<32x128xbf16>
    %c1_115 = arith.constant 1 : index
    %c0_116 = arith.constant 0 : index
    %c0_117 = arith.constant 0 : index
    %277 = vector.load %arg11[%c1_115, %c0_116, %c0_117] : memref<2x1x128xf32, #tpu.memory_space<vmem>>, vector<1x1x128xf32>
    %278 = vector.shape_cast %277 : vector<1x1x128xf32> to vector<1x128xf32>
    %279 = arith.truncf %274 : vector<16x32xf32> to vector<16x32xbf16>
    %cst_118 = arith.constant dense<0.000000e+00> : vector<16x128xf32>
    %280 = tpu.matmul %279, %276, %cst_118 {dimension_numbers = #tpu.dot_dimension_numbers<[1], [0], [0], [1], [0, 0, 1, 1], [], []>} : vector<16x32xbf16>, vector<32x128xbf16>, vector<16x128xf32> -> vector<16x128xf32>
    %281 = vector.broadcast %278 : vector<1x128xf32> to vector<16x128xf32>
    %282 = arith.addf %280, %281 : vector<16x128xf32>
    %cst_119 = arith.constant 5.000000e-01 : f32
    %283 = vector.broadcast %cst_119 : f32 to vector<16x128xf32>
    %284 = arith.mulf %283, %282 : vector<16x128xf32>
    %cst_120 = arith.constant 4.471500e-02 : f32
    %285 = vector.broadcast %cst_120 : f32 to vector<16x128xf32>
    %286 = arith.mulf %285, %282 : vector<16x128xf32>
    %287 = arith.mulf %286, %282 : vector<16x128xf32>
    %288 = arith.mulf %287, %282 : vector<16x128xf32>
    %289 = arith.addf %282, %288 : vector<16x128xf32>
    %cst_121 = arith.constant 0.797884583 : f32
    %290 = vector.broadcast %cst_121 : f32 to vector<16x128xf32>
    %291 = arith.mulf %290, %289 : vector<16x128xf32>
    %292 = math.tanh %291 : vector<16x128xf32>
    %cst_122 = arith.constant 1.000000e+00 : f32
    %293 = vector.broadcast %cst_122 : f32 to vector<16x128xf32>
    %294 = arith.addf %293, %292 : vector<16x128xf32>
    %295 = arith.mulf %284, %294 : vector<16x128xf32>
    %c1_123 = arith.constant 1 : index
    %c0_124 = arith.constant 0 : index
    %c0_125 = arith.constant 0 : index
    %296 = vector.load %arg12[%c1_123, %c0_124, %c0_125] : memref<2x128x32xbf16, #tpu.memory_space<vmem>>, vector<1x128x32xbf16>
    %297 = vector.shape_cast %296 : vector<1x128x32xbf16> to vector<128x32xbf16>
    %c1_126 = arith.constant 1 : index
    %c0_127 = arith.constant 0 : index
    %c0_128 = arith.constant 0 : index
    %298 = vector.load %arg13[%c1_126, %c0_127, %c0_128] : memref<2x1x32xf32, #tpu.memory_space<vmem>>, vector<1x1x32xf32>
    %299 = vector.shape_cast %298 : vector<1x1x32xf32> to vector<1x32xf32>
    %300 = arith.truncf %295 : vector<16x128xf32> to vector<16x128xbf16>
    %cst_129 = arith.constant dense<0.000000e+00> : vector<16x32xf32>
    %301 = tpu.matmul %300, %297, %cst_129 {dimension_numbers = #tpu.dot_dimension_numbers<[1], [0], [0], [1], [0, 0, 1, 1], [], []>} : vector<16x128xbf16>, vector<128x32xbf16>, vector<16x32xf32> -> vector<16x32xf32>
    %302 = vector.broadcast %299 : vector<1x32xf32> to vector<16x32xf32>
    %303 = arith.addf %301, %302 : vector<16x32xf32>
    %304 = arith.addf %274, %303 : vector<16x32xf32>
    %c1_130 = arith.constant 1 : index
    %c0_131 = arith.constant 0 : index
    %c0_132 = arith.constant 0 : index
    %305 = vector.load %arg14[%c1_130, %c0_131, %c0_132] : memref<2x1x32xf32, #tpu.memory_space<vmem>>, vector<1x1x32xf32>
    %306 = vector.shape_cast %305 : vector<1x1x32xf32> to vector<1x32xf32>
    %c1_133 = arith.constant 1 : index
    %c0_134 = arith.constant 0 : index
    %c0_135 = arith.constant 0 : index
    %307 = vector.load %arg15[%c1_133, %c0_134, %c0_135] : memref<2x1x32xf32, #tpu.memory_space<vmem>>, vector<1x1x32xf32>
    %308 = vector.shape_cast %307 : vector<1x1x32xf32> to vector<1x32xf32>
    %cst_136 = arith.constant dense<0.000000e+00> : vector<16xf32>
    %309 = vector.multi_reduction <add>, %304, %cst_136 [1] : vector<16x32xf32> to vector<16xf32>
    %310 = vector.shape_cast %309 : vector<16xf32> to vector<16x1xf32>
    %cst_137 = arith.constant 3.200000e+01 : f32
    %311 = vector.broadcast %cst_137 : f32 to vector<16x1xf32>
    %312 = arith.divf %310, %311 : vector<16x1xf32>
    %313 = vector.broadcast %312 : vector<16x1xf32> to vector<16x32xf32>
    %314 = arith.subf %304, %313 : vector<16x32xf32>
    %315 = arith.mulf %314, %314 : vector<16x32xf32>
    %cst_138 = arith.constant dense<0.000000e+00> : vector<16xf32>
    %316 = vector.multi_reduction <add>, %315, %cst_138 [1] : vector<16x32xf32> to vector<16xf32>
    %317 = vector.shape_cast %316 : vector<16xf32> to vector<16x1xf32>
    %cst_139 = arith.constant 3.200000e+01 : f32
    %318 = vector.broadcast %cst_139 : f32 to vector<16x1xf32>
    %319 = arith.divf %317, %318 : vector<16x1xf32>
    %320 = vector.broadcast %312 : vector<16x1xf32> to vector<16x32xf32>
    %321 = arith.subf %304, %320 : vector<16x32xf32>
    %cst_140 = arith.constant 9.99999996E-13 : f32
    %322 = vector.broadcast %cst_140 : f32 to vector<16x1xf32>
    %323 = arith.addf %319, %322 : vector<16x1xf32>
    %324 = math.rsqrt %323 : vector<16x1xf32>
    %325 = vector.broadcast %324 : vector<16x1xf32> to vector<16x32xf32>
    %326 = arith.mulf %321, %325 : vector<16x32xf32>
    %327 = vector.broadcast %306 : vector<1x32xf32> to vector<16x32xf32>
    %328 = arith.mulf %326, %327 : vector<16x32xf32>
    %329 = vector.broadcast %308 : vector<1x32xf32> to vector<16x32xf32>
    %330 = arith.addf %328, %329 : vector<16x32xf32>
    %331 = vector.shape_cast %330 : vector<16x32xf32> to vector<2x8x32xf32>
    %332 = vector.extract_strided_slice %331 {offsets = [0, 0, 0], sizes = [2, 1, 32], strides = [1, 1, 1]} : vector<2x8x32xf32> to vector<2x1x32xf32>
    %333 = vector.shape_cast %332 : vector<2x1x32xf32> to vector<2x32xf32>
    %c0_141 = arith.constant 0 : index
    %c0_142 = arith.constant 0 : index
    %334 = vector.load %arg16[%c0_141, %c0_142] : memref<32x32xbf16, #tpu.memory_space<vmem>>, vector<32x32xbf16>
    %c0_143 = arith.constant 0 : index
    %c0_144 = arith.constant 0 : index
    %335 = vector.load %arg17[%c0_143, %c0_144] : memref<1x32xf32, #tpu.memory_space<vmem>>, vector<1x32xf32>
    %336 = arith.truncf %333 : vector<2x32xf32> to vector<2x32xbf16>
    %cst_145 = arith.constant dense<0.000000e+00> : vector<2x32xf32>
    %337 = tpu.matmul %336, %334, %cst_145 {dimension_numbers = #tpu.dot_dimension_numbers<[1], [0], [0], [1], [0, 0, 1, 1], [], []>} : vector<2x32xbf16>, vector<32x32xbf16>, vector<2x32xf32> -> vector<2x32xf32>
    %338 = vector.broadcast %335 : vector<1x32xf32> to vector<2x32xf32>
    %339 = arith.addf %337, %338 : vector<2x32xf32>
    %340 = math.tanh %339 : vector<2x32xf32>
    %c0_146 = arith.constant 0 : index
    %c0_147 = arith.constant 0 : index
    %341 = vector.load %arg18[%c0_146, %c0_147] : memref<32x128xbf16, #tpu.memory_space<vmem>>, vector<32x128xbf16>
    %c0_148 = arith.constant 0 : index
    %c0_149 = arith.constant 0 : index
    %342 = vector.load %arg19[%c0_148, %c0_149] : memref<1x128xf32, #tpu.memory_space<vmem>>, vector<1x128xf32>
    %343 = arith.truncf %340 : vector<2x32xf32> to vector<2x32xbf16>
    %cst_150 = arith.constant dense<0.000000e+00> : vector<2x128xf32>
    %344 = tpu.matmul %343, %341, %cst_150 {dimension_numbers = #tpu.dot_dimension_numbers<[1], [0], [0], [1], [0, 0, 1, 1], [], []>} : vector<2x32xbf16>, vector<32x128xbf16>, vector<2x128xf32> -> vector<2x128xf32>
    %345 = vector.broadcast %342 : vector<1x128xf32> to vector<2x128xf32>
    %346 = arith.addf %344, %345 : vector<2x128xf32>
    %c0_151 = arith.constant 0 : index
    %c0_152 = arith.constant 0 : index
    %347 = vector.load %arg20[%c0_151, %c0_152] : memref<2x128xf32, #tpu.memory_space<vmem>>, vector<2x128xf32>
    tpu.vector_store %arg20[%c0_151, %c0_152], %346 {strides = array<i32>} : memref<2x128xf32, #tpu.memory_space<vmem>>, vector<2x128xf32>,
    return
  }
}

</mosaic_0001>

<llo_original>
// kernel: tpu_custom_call.1
$region0: #{tpu_custom_call.1}
  #allocation0 [shape = 'u32[]', space=smem, size = 0x4, offset = 0x4, fixed_abs, tag = 'smem constant byte address 0x4 - core index']
  #allocation1 [shape = 'u32[144,128]{1,0:T(1,128)}', space=vmem, size = 0x12000, scoped, tag = 'internal scratch']
  %s0 = inlined_call_operand.vmem [shape: f32[16,32], index: 0, kind: input, shape index: {}]
  %s1 = inlined_call_operand.vmem [shape: f32[16,16], index: 1, kind: input, shape index: {}]
  %s2 = inlined_call_operand.vmem [shape: f32[1,32], index: 2, kind: input, shape index: {}]
  %s3 = inlined_call_operand.hbm [shape: f32[1,32], index: 3, kind: input, shape index: {}]
  %s4 = inlined_call_operand.vmem [shape: bf16[2,32,96], index: 4, kind: input, shape index: {}]
  %s5 = inlined_call_operand.vmem [shape: f32[2,1,96], index: 5, kind: input, shape index: {}]
  %s6 = inlined_call_operand.vmem [shape: bf16[2,32,32], index: 6, kind: input, shape index: {}]
  %s7 = inlined_call_operand.vmem [shape: f32[2,1,32], index: 7, kind: input, shape index: {}]
  %s8 = inlined_call_operand.vmem [shape: f32[2,1,32], index: 8, kind: input, shape index: {}]
  %s9 = inlined_call_operand.vmem [shape: f32[2,1,32], index: 9, kind: input, shape index: {}]
  %s10 = inlined_call_operand.vmem [shape: bf16[2,32,128], index: 10, kind: input, shape index: {}]
  %s11 = inlined_call_operand.vmem [shape: f32[2,1,128], index: 11, kind: input, shape index: {}]
  %s12 = inlined_call_operand.vmem [shape: bf16[2,128,32], index: 12, kind: input, shape index: {}]
  %s13 = inlined_call_operand.vmem [shape: f32[2,1,32], index: 13, kind: input, shape index: {}]
  %s14 = inlined_call_operand.vmem [shape: f32[2,1,32], index: 14, kind: input, shape index: {}]
  %s15 = inlined_call_operand.vmem [shape: f32[2,1,32], index: 15, kind: input, shape index: {}]
  %s16 = inlined_call_operand.vmem [shape: bf16[32,32], index: 16, kind: input, shape index: {}]
  %s17 = inlined_call_operand.vmem [shape: f32[1,32], index: 17, kind: input, shape index: {}]
  %s18 = inlined_call_operand.vmem [shape: bf16[32,128], index: 18, kind: input, shape index: {}]
  %s19 = inlined_call_operand.vmem [shape: f32[1,128], index: 19, kind: input, shape index: {}]
  %s20 = inlined_call_operand.hbm [shape: f32[2,128], index: 20, kind: output, shape index: {}]
  %s21 = sld [smem:[#allocation0]]
  $region94: #{tpu_custom_call.1} parent=0
    _
  %s23 = ssub.s32 1, %s21
  %s24 = scalar_select 0, %s23, %s21
  $region1: #{tpu_custom_call.1} parent=0
    #allocation2 [shape = 'u8[512]{0}', space=vmem, size = 0x400, scoped, tag = 'input window, operand 3, single buffered']
    #allocation3 [shape = 's32[1]{0}', space=sflag, size = 0x4, scoped, tag = 'scoped memory for tpu_custom_call.1']
    #allocation4 [shape = 's32[1]{0}', space=sflag, size = 0x4, scoped, tag = 'scoped memory for tpu_custom_call.1']
    #allocation5 [shape = 'u8[1024]{0}', space=vmem, size = 0x400, scoped, tag = 'output window, operand 0, single buffered']
    %25 = vsyncpa [#allocation3], 0
    %26 = vsyncpa [#allocation4], 0
    // Predicated region
    $region2: #{tpu_custom_call.1} parent=1 // pred_check
      _
    $region3: #{tpu_custom_call.1} parent=1 // pred_check_branch
      %28 = sbr.rel (0) target = $region5
    $region4: #{tpu_custom_call.1} parent=1 // pred_region
      _
    $region5: #{tpu_custom_call.1} parent=1 // pred_fallthru
      _
    // Predicated region
    $region6: #{tpu_custom_call.1} parent=1 // pred_check
      _
    $region7: #{tpu_custom_call.1} parent=1 // pred_check_branch
      %30 = sbr.rel (0) target = $region9
    $region8: #{tpu_custom_call.1} parent=1 // pred_region
      _
    $region9: #{tpu_custom_call.1} parent=1 // pred_fallthru
      _
    // Predicated region
    $region10: #{tpu_custom_call.1} parent=1 // pred_check
      _
    $region11: #{tpu_custom_call.1} parent=1 // pred_check_branch
      %32 = sbr.rel (0) target = $region13
    $region12: #{tpu_custom_call.1} parent=1 // pred_region
      _
    $region13: #{tpu_custom_call.1} parent=1 // pred_fallthru
      _
    // Predicated region
    $region14: #{tpu_custom_call.1} parent=1 // pred_check
      _
    $region15: #{tpu_custom_call.1} parent=1 // pred_check_branch
      %34 = sbr.rel (0) target = $region17
    $region16: #{tpu_custom_call.1} parent=1 // pred_region
      %s36 = ssub.s32 16, 16
      %37 = vsyncadd [#allocation3], %s36
      %s39 = sshll.u32 [#allocation2], 4
      %s40 = int_to_ptr.vmem [resolvable:$true] %s39
      %42 = dma.hbm_to_vmem [thread:$0]  %s3, 16, %s40, [#allocation3]
    $region17: #{tpu_custom_call.1} parent=1 // pred_fallthru
      _
    // Predicated region
    $region18: #{tpu_custom_call.1} parent=1 // pred_check
      _
    $region19: #{tpu_custom_call.1} parent=1 // pred_check_branch
      %44 = sbr.rel (0) target = $region21
    $region20: #{tpu_custom_call.1} parent=1 // pred_region
      _
    $region21: #{tpu_custom_call.1} parent=1 // pred_fallthru
      _
    // Predicated region
    $region22: #{tpu_custom_call.1} parent=1 // pred_check
      _
    $region23: #{tpu_custom_call.1} parent=1 // pred_check_branch
      %46 = sbr.rel (0) target = $region25
    $region24: #{tpu_custom_call.1} parent=1 // pred_region
      _
    $region25: #{tpu_custom_call.1} parent=1 // pred_fallthru
      _
    // Predicated region
    $region26: #{tpu_custom_call.1} parent=1 // pred_check
      _
    $region27: #{tpu_custom_call.1} parent=1 // pred_check_branch
      %48 = sbr.rel (0) target = $region29
    $region28: #{tpu_custom_call.1} parent=1 // pred_region
      _
    $region29: #{tpu_custom_call.1} parent=1 // pred_fallthru
      _
    // Predicated region
    $region30: #{tpu_custom_call.1} parent=1 // pred_check
      _
    $region31: #{tpu_custom_call.1} parent=1 // pred_check_branch
      %50 = sbr.rel (0) target = $region33
    $region32: #{tpu_custom_call.1} parent=1 // pred_region
      _
    $region33: #{tpu_custom_call.1} parent=1 // pred_fallthru
      _
    // Predicated region
    $region34: #{tpu_custom_call.1} parent=1 // pred_check
      _
    $region35: #{tpu_custom_call.1} parent=1 // pred_check_branch
      %52 = sbr.rel (0) target = $region37
    $region36: #{tpu_custom_call.1} parent=1 // pred_region
      _
    $region37: #{tpu_custom_call.1} parent=1 // pred_fallthru
      _
    // Predicated region
    $region38: #{tpu_custom_call.1} parent=1 // pred_check
      _
    $region39: #{tpu_custom_call.1} parent=1 // pred_check_branch
      %54 = sbr.rel (0) target = $region41
    $region40: #{tpu_custom_call.1} parent=1 // pred_region
      _
    $region41: #{tpu_custom_call.1} parent=1 // pred_fallthru
      _
    // Predicated region
    $region42: #{tpu_custom_call.1} parent=1 // pred_check
      _
    $region43: #{tpu_custom_call.1} parent=1 // pred_check_branch
      %56 = sbr.rel (0) target = $region45
    $region44: #{tpu_custom_call.1} parent=1 // pred_region
      _
    $region45: #{tpu_custom_call.1} parent=1 // pred_fallthru
      _
    // Predicated region
    $region46: #{tpu_custom_call.1} parent=1 // pred_check
      _
    $region47: #{tpu_custom_call.1} parent=1 // pred_check_branch
      %58 = sbr.rel (0) target = $region49
    $region48: #{tpu_custom_call.1} parent=1 // pred_region
      _
    $region49: #{tpu_custom_call.1} parent=1 // pred_fallthru
      _
    // Predicated region
    $region50: #{tpu_custom_call.1} parent=1 // pred_check
      _
    $region51: #{tpu_custom_call.1} parent=1 // pred_check_branch
      %60 = sbr.rel (0) target = $region53
    $region52: #{tpu_custom_call.1} parent=1 // pred_region
      _
    $region53: #{tpu_custom_call.1} parent=1 // pred_fallthru
      _
    // Predicated region
    $region54: #{tpu_custom_call.1} parent=1 // pred_check
      _
    $region55: #{tpu_custom_call.1} parent=1 // pred_check_branch
      %62 = sbr.rel (0) target = $region57
    $region56: #{tpu_custom_call.1} parent=1 // pred_region
      _
    $region57: #{tpu_custom_call.1} parent=1 // pred_fallthru
      _
    // Predicated region
    $region58: #{tpu_custom_call.1} parent=1 // pred_check
      _
    $region59: #{tpu_custom_call.1} parent=1 // pred_check_branch
      %64 = sbr.rel (0) target = $region61
    $region60: #{tpu_custom_call.1} parent=1 // pred_region
      _
    $region61: #{tpu_custom_call.1} parent=1 // pred_fallthru
      _
    // Predicated region
    $region62: #{tpu_custom_call.1} parent=1 // pred_check
      _
    $region63: #{tpu_custom_call.1} parent=1 // pred_check_branch
      %66 = sbr.rel (0) target = $region65
    $region64: #{tpu_custom_call.1} parent=1 // pred_region
      _
    $region65: #{tpu_custom_call.1} parent=1 // pred_fallthru
      _
    // Predicated region
    $region66: #{tpu_custom_call.1} parent=1 // pred_check
      _
    $region67: #{tpu_custom_call.1} parent=1 // pred_check_branch
      %68 = sbr.rel (0) target = $region69
    $region68: #{tpu_custom_call.1} parent=1 // pred_region
      _
    $region69: #{tpu_custom_call.1} parent=1 // pred_fallthru
      _
    // Predicated region
    $region70: #{tpu_custom_call.1} parent=1 // pred_check
      _
    $region71: #{tpu_custom_call.1} parent=1 // pred_check_branch
      %70 = sbr.rel (0) target = $region73
    $region72: #{tpu_custom_call.1} parent=1 // pred_region
      _
    $region73: #{tpu_custom_call.1} parent=1 // pred_fallthru
      _
    // Predicated region
    $region74: #{tpu_custom_call.1} parent=1 // pred_check
      _
    $region75: #{tpu_custom_call.1} parent=1 // pred_check_branch
      %72 = sbr.rel (0) target = $region77
    $region76: #{tpu_custom_call.1} parent=1 // pred_region
      _
    $region77: #{tpu_custom_call.1} parent=1 // pred_fallthru
      _
    // Predicated region
    $region78: #{tpu_custom_call.1} parent=1 // pred_check
      _
    $region79: #{tpu_custom_call.1} parent=1 // pred_check_branch
      %74 = sbr.rel (0) target = $region81
    $region80: #{tpu_custom_call.1} parent=1 // pred_region
      _
    $region81: #{tpu_custom_call.1} parent=1 // pred_fallthru
      _
    // Predicated region
    $region82: #{tpu_custom_call.1} parent=1 // pred_check
      _
    $region83: #{tpu_custom_call.1} parent=1 // pred_check_branch
      %76 = sbr.rel (0) target = $region85
    $region84: #{tpu_custom_call.1} parent=1 // pred_region
      %77 = dma.done [#allocation3], 16
    $region85: #{tpu_custom_call.1} parent=1 // pred_fallthru
      _
    %v79 = vld [vmem:[%s0] sm:$0xff]
    %v80 = vld [vmem:[%s0 + $0x8] sm:$0xff]
    %v81 = vld [vmem:[%s2] sm:$0x1]
    %v82 = vld [vmem:[#allocation2] sm:$0x1]
    %vm83 = vcmask 261120
    %v84 = vsel %vm83, %v79, 0.0
    %85 = vadd.xlane.f32.xlu0 %v84
    %v86 = vpop.xlane.xlu0 %85
    %v87 = vsel %vm83, %v80, 0.0
    %88 = vadd.xlane.f32.xlu0 %v87
    %v89 = vpop.xlane.xlu0 %88
    %v90 = vrcp.pop 32.0
    %v91 = vmul.f32 %v86, %v90
    %v92 = vmul.f32 %v89, %v90
    %v93 = vsub.f32 %v79, %v91
    %v94 = vsub.f32 %v80, %v92
    %v95 = vmul.f32 %v93, %v93
    %v96 = vmul.f32 %v94, %v94
    %v97 = vsel %vm83, %v95, 0.0
    %98 = vadd.xlane.f32.xlu0 %v97
    %v99 = vpop.xlane.xlu0 %98
    %v100 = vsel %vm83, %v96, 0.0
    %101 = vadd.xlane.f32.xlu0 %v100
    %v102 = vpop.xlane.xlu0 %101
    %v103 = vmul.f32 %v99, %v90
    %v104 = vmul.f32 %v102, %v90
    %v105 = vadd.f32 %v103, 1e-12
    %v106 = vadd.f32 %v104, 1e-12
    %v107 = vrsqrt.pop %v105
    %v108 = vrsqrt.pop %v106
    %v109 = vmul.f32 %v93, %v107
    %v110 = vmul.f32 %v94, %v108
    %v112 = vlaneseq
    %v113 = vshrl.u32 %v112, 7
    %v114 = vsub.s32 0, %v113
    %v115 = vrot.slane %v81, %v114
    %v117 = vmul.f32 %v109, %v115
    %v118 = vmul.f32 %v110, %v115
    %v120 = vlaneseq
    %v121 = vshrl.u32 %v120, 7
    %v122 = vsub.s32 0, %v121
    %v123 = vrot.slane %v82, %v122
    %v125 = vadd.f32 %v117, %v123
    %v126 = vadd.f32 %v118, %v123
    %v127 = vld [vmem:[%s1] sm:$0xff]
    %v128 = vld [vmem:[%s1 + $0x8] sm:$0xff]
    %v129 = vlaneseq
    %v130 = vand.u32 %v129, 127
    %vm131 = vcmp.ge.s32.totalorder %v130, 0
    %vm132 = vcmp.lt.s32.totalorder %v130, 16
    %vm133 = vmand %vm131, %vm132
    %v134 = vsel %vm133, 1, 0
    %v135 = vcvt.s32.f32 %v134
    %vm136 = vcmp.ge.s32.totalorder %v130, 16
    %vm137 = vcmp.lt.s32.totalorder %v130, 32
    %vm138 = vmand %vm136, %vm137
    %v139 = vsel %vm138, 1, 0
    %v140 = vcvt.s32.f32 %v139
    %v141 = vld [vmem:[%s4] sm:$0xf]
    %v142 = vld [vmem:[%s4 + $0x4] sm:$0xf]
    %v143 = vld [vmem:[%s4 + $0x8] sm:$0xf]
    %v144 = vld [vmem:[%s4 + $0xc] sm:$0xf]
    %v145 = vld [vmem:[%s5] sm:$0x1]
    %v146 = vpack.c.bf16 %v126, %v125
    %v148 = vlaneseq
    %v149 = vshrl.u32 %v148, 7
    %v150 = vsub.s32 0, %v149
    %v151 = vrot.slane %v145, %v150
    %v157 = vunpack.c.l.b16 %v141
    %v158 = vunpack.c.l.b16 %v142
    %v159 = vunpack.c.l.b16 %v143
    %v160 = vunpack.c.l.b16 %v144
    %v161 = vpack.c.b16 %v158, %v157
    %v162 = vpack.c.b16 %v160, %v159
    %v166 = vsel %vm83, %v146, 0
    %168 = vmatprep.subr.bf16.mxu0 0
    %169 = vmatpush1.bf16.msra.mxu0 %v161
    %170 = vmatprep.subr.bf16.mxu0 0
    %171 = vmatpush1.bf16.msra.mxu0 %v162
    %172 = vmatprep.subr.bf16.mxu0 0
    %173 = vmatpush1.bf16.msra.mxu0 0
    %174 = vmatprep.subr.bf16.mxu0 0
    %175 = vmatpush1.bf16.msra.mxu0 0
    %176 = vmatprep.subr.bf16.mxu0 0
    %177 = vmatpush1.bf16.msra.mxu0 0
    %178 = vmatprep.subr.bf16.mxu0 0
    %179 = vmatpush1.bf16.msra.mxu0 0
    %180 = vmatprep.subr.bf16.mxu0 0
    %181 = vmatpush1.bf16.msra.mxu0 0
    %182 = vmatprep.subr.bf16.mxu0 0
    %183 = vmatpush1.bf16.msra.mxu0 0
    %184 = vmatprep.subr.bf16.mxu0 0
    %185 = vmatpush1.bf16.msra.mxu0 0
    %186 = vmatprep.subr.bf16.mxu0 0
    %187 = vmatpush1.bf16.msra.mxu0 0
    %188 = vmatprep.subr.bf16.mxu0 0
    %189 = vmatpush1.bf16.msra.mxu0 0
    %190 = vmatprep.subr.bf16.mxu0 0
    %191 = vmatpush1.bf16.msra.mxu0 0
    %192 = vmatprep.subr.bf16.mxu0 0
    %193 = vmatpush1.bf16.msra.mxu0 0
    %194 = vmatprep.subr.bf16.mxu0 0
    %195 = vmatpush1.bf16.msra.mxu0 0
    %196 = vmatprep.subr.bf16.mxu0 0
    %197 = vmatpush1.bf16.msra.mxu0 0
    %198 = vmatprep.subr.bf16.mxu0 0
    %199 = vmatpush1.bf16.msra.mxu0 0
    %200 = vmatprep.mubr.bf16.mxu0 0
    %201 = vmatmul.mubr.bf16.gmra.mrb[0].mxu0 %v166
    %v202 = vpop.f32.mrb[0].mxu0
    %v203 = vadd.f32 %v151, %v202
    %v204 = vpop.f32.mrb[0].mxu0
    %v205 = vpop.f32.mrb[0].mxu0
    %v206 = vadd.f32 %v151, %v205
    %v207 = vpop.f32.mrb[0].mxu0
    %208 = vdwg.mxu0
    %v209 = vmul.f32 %v203, %v135
    %v210 = vmul.f32 %v206, %v135
    %213 = vrot.lane.b32.xlu0 %v203, 96
    %v214 = vpop.permute.xlu0 %213
    %215 = vrot.lane.b32.xlu0 %v206, 96
    %v216 = vpop.permute.xlu0 %215
    %v218 = vsel %vm83, %v209, 0
    %v221 = vsel %vm83, %v210, 0
    %v223 = vsel %vm83, %v214, 0
    %v225 = vsel %vm83, %v216, 0
    %227 = vmatprep.subr.mxu0 0.0
    %228 = vmatpush1.xpose.msra.mxu0 %v223
    %229 = vmatprep.subr.mxu0 0.0
    %230 = vmatpush1.xpose.msra.mxu0 %v225
    %231 = vmatprep.subr.mxu0 0.0
    %232 = vmatpush1.xpose.msra.mxu0 0.0
    %233 = vmatprep.subr.mxu0 0.0
    %234 = vmatpush1.xpose.msra.mxu0 0.0
    %235 = vmatprep.subr.mxu0 0.0
    %236 = vmatpush1.xpose.msra.mxu0 0.0
    %237 = vmatprep.subr.mxu0 0.0
    %238 = vmatpush1.xpose.msra.mxu0 0.0
    %239 = vmatprep.subr.mxu0 0.0
    %240 = vmatpush1.xpose.msra.mxu0 0.0
    %241 = vmatprep.subr.mxu0 0.0
    %242 = vmatpush1.xpose.msra.mxu0 0.0
    %243 = vmatprep.subr.mxu0 0.0
    %244 = vmatpush1.xpose.msra.mxu0 0.0
    %245 = vmatprep.subr.mxu0 0.0
    %246 = vmatpush1.xpose.msra.mxu0 0.0
    %247 = vmatprep.subr.mxu0 0.0
    %248 = vmatpush1.xpose.msra.mxu0 0.0
    %249 = vmatprep.subr.mxu0 0.0
    %250 = vmatpush1.xpose.msra.mxu0 0.0
    %251 = vmatprep.subr.mxu0 0.0
    %252 = vmatpush1.xpose.msra.mxu0 0.0
    %253 = vmatprep.subr.mxu0 0.0
    %254 = vmatpush1.xpose.msra.mxu0 0.0
    %255 = vmatprep.subr.mxu0 0.0
    %256 = vmatpush1.xpose.msra.mxu0 0.0
    %257 = vmatprep.subr.mxu0 0.0
    %258 = vmatpush1.xpose.msra.mxu0 0.0
    %259 = vmatprep.subr.mxu0 0.0
    %260 = vmatpush1.xpose.msra.mxu0 0.0
    %261 = vmatprep.subr.mxu0 0.0
    %262 = vmatpush1.xpose.msra.mxu0 0.0
    %263 = vmatprep.subr.mxu0 0.0
    %264 = vmatpush1.xpose.msra.mxu0 0.0
    %265 = vmatprep.subr.mxu0 0.0
    %266 = vmatpush1.xpose.msra.mxu0 0.0
    %267 = vmatprep.subr.mxu0 0.0
    %268 = vmatpush1.xpose.msra.mxu0 0.0
    %269 = vmatprep.subr.mxu0 0.0
    %270 = vmatpush1.xpose.msra.mxu0 0.0
    %271 = vmatprep.subr.mxu0 0.0
    %272 = vmatpush1.xpose.msra.mxu0 0.0
    %273 = vmatprep.subr.mxu0 0.0
    %274 = vmatpush1.xpose.msra.mxu0 0.0
    %275 = vmatprep.subr.mxu0 0.0
    %276 = vmatpush1.xpose.msra.mxu0 0.0
    %277 = vmatprep.subr.mxu0 0.0
    %278 = vmatpush1.xpose.msra.mxu0 0.0
    %279 = vmatprep.subr.mxu0 0.0
    %280 = vmatpush1.xpose.msra.mxu0 0.0
    %281 = vmatprep.subr.mxu0 0.0
    %282 = vmatpush1.xpose.msra.mxu0 0.0
    %283 = vmatprep.subr.mxu0 0.0
    %284 = vmatpush1.xpose.msra.mxu0 0.0
    %285 = vmatprep.subr.mxu0 0.0
    %286 = vmatpush1.xpose.msra.mxu0 0.0
    %287 = vmatprep.subr.mxu0 0.0
    %288 = vmatpush1.xpose.msra.mxu0 0.0
    %289 = vmatprep.subr.mxu0 0.0
    %290 = vmatpush1.xpose.msra.mxu0 0.0
    %291 = vmatprep.mubr.f32.mxu0 0.0
    %292 = vmatmul.mubr.f32.gmra.mrb[0].mxu0 %v218
    %v293 = vpop.f32.mrb[0].mxu0
    %v294 = vadd.f32 0.0, %v293
    %v295 = vpop.f32.mrb[0].mxu0
    %296 = vmatprep.mubr.f32.mxu0 0.0
    %297 = vmatmul.mubr.f32.gmra.mrb[0].mxu0 %v221
    %v298 = vpop.f32.mrb[0].mxu0
    %v299 = vadd.f32 0.0, %v298
    %v300 = vpop.f32.mrb[0].mxu0
    %301 = vdwg.mxu0
    %v302 = vmul.f32 %v294, 0.25
    %v303 = vmul.f32 %v299, 0.25
    %v304 = vadd.f32 %v302, %v127
    %v305 = vadd.f32 %v303, %v128
    %vm306 = vcmask 130048
    %v307 = vsel %vm306, %v304, -inf
    %308 = vmax.xlane.f32.xlu0 %v307
    %v309 = vpop.xlane.xlu0 %308
    %v310 = vsel %vm306, %v305, -inf
    %311 = vmax.xlane.f32.xlu0 %v310
    %v312 = vpop.xlane.xlu0 %311
    %v313 = vsub.f32 %v304, %v309
    %v314 = vsub.f32 %v305, %v312
    %v315 = vmul.f32 %v313, 1.442695
    %v316 = vpow.pop %v315
    %v317 = vmul.f32 %v314, 1.442695
    %v318 = vpow.pop %v317
    %v319 = vsel %vm306, %v316, 0.0
    %320 = vadd.xlane.f32.xlu0 %v319
    %v321 = vpop.xlane.xlu0 %320
    %v322 = vsel %vm306, %v318, 0.0
    %323 = vadd.xlane.f32.xlu0 %v322
    %v324 = vpop.xlane.xlu0 %323
    %v325 = vrcp.pop %v321
    %v326 = vrcp.pop %v324
    %v327 = vmul.f32 %v316, %v325
    %v328 = vmul.f32 %v318, %v326
    %330 = vrot.lane.b32.xlu0 %v135, 64
    %v331 = vpop.permute.xlu0 %330
    %v333 = vmul.f32 %v203, %v331
    %v334 = vmul.f32 %v206, %v331
    %v335 = vmul.f32 %v203, %v140
    %v336 = vmul.f32 %v206, %v140
    %v338 = vsel %vm83, %v335, 0
    %v341 = vsel %vm83, %v336, 0
    %343 = vmatprep.subr.mxu0 0.0
    %344 = vmatpush1.xpose.msra.mxu0 %v223
    %345 = vmatprep.subr.mxu0 0.0
    %346 = vmatpush1.xpose.msra.mxu0 %v225
    %347 = vmatprep.subr.mxu0 0.0
    %348 = vmatpush1.xpose.msra.mxu0 0.0
    %349 = vmatprep.subr.mxu0 0.0
    %350 = vmatpush1.xpose.msra.mxu0 0.0
    %351 = vmatprep.subr.mxu0 0.0
    %352 = vmatpush1.xpose.msra.mxu0 0.0
    %353 = vmatprep.subr.mxu0 0.0
    %354 = vmatpush1.xpose.msra.mxu0 0.0
    %355 = vmatprep.subr.mxu0 0.0
    %356 = vmatpush1.xpose.msra.mxu0 0.0
    %357 = vmatprep.subr.mxu0 0.0
    %358 = vmatpush1.xpose.msra.mxu0 0.0
    %359 = vmatprep.subr.mxu0 0.0
    %360 = vmatpush1.xpose.msra.mxu0 0.0
    %361 = vmatprep.subr.mxu0 0.0
    %362 = vmatpush1.xpose.msra.mxu0 0.0
    %363 = vmatprep.subr.mxu0 0.0
    %364 = vmatpush1.xpose.msra.mxu0 0.0
    %365 = vmatprep.subr.mxu0 0.0
    %366 = vmatpush1.xpose.msra.mxu0 0.0
    %367 = vmatprep.subr.mxu0 0.0
    %368 = vmatpush1.xpose.msra.mxu0 0.0
    %369 = vmatprep.subr.mxu0 0.0
    %370 = vmatpush1.xpose.msra.mxu0 0.0
    %371 = vmatprep.subr.mxu0 0.0
    %372 = vmatpush1.xpose.msra.mxu0 0.0
    %373 = vmatprep.subr.mxu0 0.0
    %374 = vmatpush1.xpose.msra.mxu0 0.0
    %375 = vmatprep.subr.mxu0 0.0
    %376 = vmatpush1.xpose.msra.mxu0 0.0
    %377 = vmatprep.subr.mxu0 0.0
    %378 = vmatpush1.xpose.msra.mxu0 0.0
    %379 = vmatprep.subr.mxu0 0.0
    %380 = vmatpush1.xpose.msra.mxu0 0.0
    %381 = vmatprep.subr.mxu0 0.0
    %382 = vmatpush1.xpose.msra.mxu0 0.0
    %383 = vmatprep.subr.mxu0 0.0
    %384 = vmatpush1.xpose.msra.mxu0 0.0
    %385 = vmatprep.subr.mxu0 0.0
    %386 = vmatpush1.xpose.msra.mxu0 0.0
    %387 = vmatprep.subr.mxu0 0.0
    %388 = vmatpush1.xpose.msra.mxu0 0.0
    %389 = vmatprep.subr.mxu0 0.0
    %390 = vmatpush1.xpose.msra.mxu0 0.0
    %391 = vmatprep.subr.mxu0 0.0
    %392 = vmatpush1.xpose.msra.mxu0 0.0
    %393 = vmatprep.subr.mxu0 0.0
    %394 = vmatpush1.xpose.msra.mxu0 0.0
    %395 = vmatprep.subr.mxu0 0.0
    %396 = vmatpush1.xpose.msra.mxu0 0.0
    %397 = vmatprep.subr.mxu0 0.0
    %398 = vmatpush1.xpose.msra.mxu0 0.0
    %399 = vmatprep.subr.mxu0 0.0
    %400 = vmatpush1.xpose.msra.mxu0 0.0
    %401 = vmatprep.subr.mxu0 0.0
    %402 = vmatpush1.xpose.msra.mxu0 0.0
    %403 = vmatprep.subr.mxu0 0.0
    %404 = vmatpush1.xpose.msra.mxu0 0.0
    %405 = vmatprep.subr.mxu0 0.0
    %406 = vmatpush1.xpose.msra.mxu0 0.0
    %407 = vmatprep.mubr.f32.mxu0 0.0
    %408 = vmatmul.mubr.f32.gmra.mrb[0].mxu0 %v338
    %v409 = vpop.f32.mrb[0].mxu0
    %v410 = vadd.f32 0.0, %v409
    %v411 = vpop.f32.mrb[0].mxu0
    %412 = vmatprep.mubr.f32.mxu0 0.0
    %413 = vmatmul.mubr.f32.gmra.mrb[0].mxu0 %v341
    %v414 = vpop.f32.mrb[0].mxu0
    %v415 = vadd.f32 0.0, %v414
    %v416 = vpop.f32.mrb[0].mxu0
    %417 = vdwg.mxu0
    %v418 = vmul.f32 %v410, 0.25
    %v419 = vmul.f32 %v415, 0.25
    %v420 = vadd.f32 %v418, %v127
    %v421 = vadd.f32 %v419, %v128
    %v422 = vsel %vm306, %v420, -inf
    %423 = vmax.xlane.f32.xlu0 %v422
    %v424 = vpop.xlane.xlu0 %423
    %v425 = vsel %vm306, %v421, -inf
    %426 = vmax.xlane.f32.xlu0 %v425
    %v427 = vpop.xlane.xlu0 %426
    %v428 = vsub.f32 %v420, %v424
    %v429 = vsub.f32 %v421, %v427
    %v430 = vmul.f32 %v428, 1.442695
    %v431 = vpow.pop %v430
    %v432 = vmul.f32 %v429, 1.442695
    %v433 = vpow.pop %v432
    %v434 = vsel %vm306, %v431, 0.0
    %435 = vadd.xlane.f32.xlu0 %v434
    %v436 = vpop.xlane.xlu0 %435
    %v437 = vsel %vm306, %v433, 0.0
    %438 = vadd.xlane.f32.xlu0 %v437
    %v439 = vpop.xlane.xlu0 %438
    %v440 = vrcp.pop %v436
    %v441 = vrcp.pop %v439
    %v442 = vmul.f32 %v431, %v440
    %v443 = vmul.f32 %v433, %v441
    %445 = vrot.lane.b32.xlu0 %v140, 64
    %v446 = vpop.permute.xlu0 %445
    %v448 = vmul.f32 %v203, %v446
    %v449 = vmul.f32 %v206, %v446
    %452 = vrot.lane.b32.xlu0 %v448, 64
    %v453 = vpop.permute.xlu0 %452
    %454 = vrot.lane.b32.xlu0 %v449, 64
    %v455 = vpop.permute.xlu0 %454
    %v459 = vsel %vm306, %v442, 0
    %v462 = vsel %vm306, %v443, 0
    %464 = vmatprep.subr.mxu0 0.0
    %465 = vmatpush1.msra.mxu0 %v453
    %466 = vmatprep.subr.mxu0 0.0
    %467 = vmatpush1.msra.mxu0 %v455
    %468 = vmatprep.subr.mxu0 0.0
    %469 = vmatpush1.msra.mxu0 0.0
    %470 = vmatprep.subr.mxu0 0.0
    %471 = vmatpush1.msra.mxu0 0.0
    %472 = vmatprep.subr.mxu0 0.0
    %473 = vmatpush1.msra.mxu0 0.0
    %474 = vmatprep.subr.mxu0 0.0
    %475 = vmatpush1.msra.mxu0 0.0
    %476 = vmatprep.subr.mxu0 0.0
    %477 = vmatpush1.msra.mxu0 0.0
    %478 = vmatprep.subr.mxu0 0.0
    %479 = vmatpush1.msra.mxu0 0.0
    %480 = vmatprep.subr.mxu0 0.0
    %481 = vmatpush1.msra.mxu0 0.0
    %482 = vmatprep.subr.mxu0 0.0
    %483 = vmatpush1.msra.mxu0 0.0
    %484 = vmatprep.subr.mxu0 0.0
    %485 = vmatpush1.msra.mxu0 0.0
    %486 = vmatprep.subr.mxu0 0.0
    %487 = vmatpush1.msra.mxu0 0.0
    %488 = vmatprep.subr.mxu0 0.0
    %489 = vmatpush1.msra.mxu0 0.0
    %490 = vmatprep.subr.mxu0 0.0
    %491 = vmatpush1.msra.mxu0 0.0
    %492 = vmatprep.subr.mxu0 0.0
    %493 = vmatpush1.msra.mxu0 0.0
    %494 = vmatprep.subr.mxu0 0.0
    %495 = vmatpush1.msra.mxu0 0.0
    %496 = vmatprep.subr.mxu0 0.0
    %497 = vmatpush1.msra.mxu0 0.0
    %498 = vmatprep.subr.mxu0 0.0
    %499 = vmatpush1.msra.mxu0 0.0
    %500 = vmatprep.subr.mxu0 0.0
    %501 = vmatpush1.msra.mxu0 0.0
    %502 = vmatprep.subr.mxu0 0.0
    %503 = vmatpush1.msra.mxu0 0.0
    %504 = vmatprep.subr.mxu0 0.0
    %505 = vmatpush1.msra.mxu0 0.0
    %506 = vmatprep.subr.mxu0 0.0
    %507 = vmatpush1.msra.mxu0 0.0
    %508 = vmatprep.subr.mxu0 0.0
    %509 = vmatpush1.msra.mxu0 0.0
    %510 = vmatprep.subr.mxu0 0.0
    %511 = vmatpush1.msra.mxu0 0.0
    %512 = vmatprep.subr.mxu0 0.0
    %513 = vmatpush1.msra.mxu0 0.0
    %514 = vmatprep.subr.mxu0 0.0
    %515 = vmatpush1.msra.mxu0 0.0
    %516 = vmatprep.subr.mxu0 0.0
    %517 = vmatpush1.msra.mxu0 0.0
    %518 = vmatprep.subr.mxu0 0.0
    %519 = vmatpush1.msra.mxu0 0.0
    %520 = vmatprep.subr.mxu0 0.0
    %521 = vmatpush1.msra.mxu0 0.0
    %522 = vmatprep.subr.mxu0 0.0
    %523 = vmatpush1.msra.mxu0 0.0
    %524 = vmatprep.subr.mxu0 0.0
    %525 = vmatpush1.msra.mxu0 0.0
    %526 = vmatprep.subr.mxu0 0.0
    %527 = vmatpush1.msra.mxu0 0.0
    %528 = vmatprep.mubr.f32.mxu0 0.0
    %529 = vmatmul.mubr.f32.gmra.mrb[0].mxu0 %v459
    %v530 = vpop.f32.mrb[0].mxu0
    %v531 = vadd.f32 0.0, %v530
    %v532 = vpop.f32.mrb[0].mxu0
    %533 = vmatprep.mubr.f32.mxu0 0.0
    %534 = vmatmul.mubr.f32.gmra.mrb[0].mxu0 %v462
    %v535 = vpop.f32.mrb[0].mxu0
    %v536 = vadd.f32 0.0, %v535
    %v537 = vpop.f32.mrb[0].mxu0
    %538 = vdwg.mxu0
    %541 = vrot.lane.b32.xlu0 %v333, 64
    %v542 = vpop.permute.xlu0 %541
    %543 = vrot.lane.b32.xlu0 %v334, 64
    %v544 = vpop.permute.xlu0 %543
    %v548 = vsel %vm306, %v327, 0
    %v551 = vsel %vm306, %v328, 0
    %553 = vmatprep.subr.mxu0 0.0
    %554 = vmatpush1.msra.mxu0 %v542
    %555 = vmatprep.subr.mxu0 0.0
    %556 = vmatpush1.msra.mxu0 %v544
    %557 = vmatprep.subr.mxu0 0.0
    %558 = vmatpush1.msra.mxu0 0.0
    %559 = vmatprep.subr.mxu0 0.0
    %560 = vmatpush1.msra.mxu0 0.0
    %561 = vmatprep.subr.mxu0 0.0
    %562 = vmatpush1.msra.mxu0 0.0
    %563 = vmatprep.subr.mxu0 0.0
    %564 = vmatpush1.msra.mxu0 0.0
    %565 = vmatprep.subr.mxu0 0.0
    %566 = vmatpush1.msra.mxu0 0.0
    %567 = vmatprep.subr.mxu0 0.0
    %568 = vmatpush1.msra.mxu0 0.0
    %569 = vmatprep.subr.mxu0 0.0
    %570 = vmatpush1.msra.mxu0 0.0
    %571 = vmatprep.subr.mxu0 0.0
    %572 = vmatpush1.msra.mxu0 0.0
    %573 = vmatprep.subr.mxu0 0.0
    %574 = vmatpush1.msra.mxu0 0.0
    %575 = vmatprep.subr.mxu0 0.0
    %576 = vmatpush1.msra.mxu0 0.0
    %577 = vmatprep.subr.mxu0 0.0
    %578 = vmatpush1.msra.mxu0 0.0
    %579 = vmatprep.subr.mxu0 0.0
    %580 = vmatpush1.msra.mxu0 0.0
    %581 = vmatprep.subr.mxu0 0.0
    %582 = vmatpush1.msra.mxu0 0.0
    %583 = vmatprep.subr.mxu0 0.0
    %584 = vmatpush1.msra.mxu0 0.0
    %585 = vmatprep.subr.mxu0 0.0
    %586 = vmatpush1.msra.mxu0 0.0
    %587 = vmatprep.subr.mxu0 0.0
    %588 = vmatpush1.msra.mxu0 0.0
    %589 = vmatprep.subr.mxu0 0.0
    %590 = vmatpush1.msra.mxu0 0.0
    %591 = vmatprep.subr.mxu0 0.0
    %592 = vmatpush1.msra.mxu0 0.0
    %593 = vmatprep.subr.mxu0 0.0
    %594 = vmatpush1.msra.mxu0 0.0
    %595 = vmatprep.subr.mxu0 0.0
    %596 = vmatpush1.msra.mxu0 0.0
    %597 = vmatprep.subr.mxu0 0.0
    %598 = vmatpush1.msra.mxu0 0.0
    %599 = vmatprep.subr.mxu0 0.0
    %600 = vmatpush1.msra.mxu0 0.0
    %601 = vmatprep.subr.mxu0 0.0
    %602 = vmatpush1.msra.mxu0 0.0
    %603 = vmatprep.subr.mxu0 0.0
    %604 = vmatpush1.msra.mxu0 0.0
    %605 = vmatprep.subr.mxu0 0.0
    %606 = vmatpush1.msra.mxu0 0.0
    %607 = vmatprep.subr.mxu0 0.0
    %608 = vmatpush1.msra.mxu0 0.0
    %609 = vmatprep.subr.mxu0 0.0
    %610 = vmatpush1.msra.mxu0 0.0
    %611 = vmatprep.subr.mxu0 0.0
    %612 = vmatpush1.msra.mxu0 0.0
    %613 = vmatprep.subr.mxu0 0.0
    %614 = vmatpush1.msra.mxu0 0.0
    %615 = vmatprep.subr.mxu0 0.0
    %616 = vmatpush1.msra.mxu0 0.0
    %617 = vmatprep.mubr.f32.mxu0 0.0
    %618 = vmatmul.mubr.f32.gmra.mrb[0].mxu0 %v548
    %v619 = vpop.f32.mrb[0].mxu0
    %v620 = vadd.f32 %v531, %v619
    %v621 = vpop.f32.mrb[0].mxu0
    %622 = vmatprep.mubr.f32.mxu0 0.0
    %623 = vmatmul.mubr.f32.gmra.mrb[0].mxu0 %v551
    %v624 = vpop.f32.mrb[0].mxu0
    %v625 = vadd.f32 %v536, %v624
    %v626 = vpop.f32.mrb[0].mxu0
    %627 = vdwg.mxu0
    %v628 = vld [vmem:[%s6] sm:$0xf]
    %v629 = vld [vmem:[%s6 + $0x4] sm:$0xf]
    %v630 = vld [vmem:[%s6 + $0x8] sm:$0xf]
    %v631 = vld [vmem:[%s6 + $0xc] sm:$0xf]
    %v632 = vld [vmem:[%s7] sm:$0x1]
    %v633 = vpack.c.bf16 %v625, %v620
    %v635 = vlaneseq
    %v636 = vshrl.u32 %v635, 7
    %v637 = vsub.s32 0, %v636
    %v638 = vrot.slane %v632, %v637
    %v644 = vunpack.c.l.b16 %v628
    %v645 = vunpack.c.l.b16 %v629
    %v646 = vunpack.c.l.b16 %v630
    %v647 = vunpack.c.l.b16 %v631
    %v648 = vpack.c.b16 %v645, %v644
    %v649 = vpack.c.b16 %v647, %v646
    %v653 = vsel %vm83, %v633, 0
    %655 = vmatprep.subr.bf16.mxu0 0
    %656 = vmatpush1.bf16.msra.mxu0 %v648
    %657 = vmatprep.subr.bf16.mxu0 0
    %658 = vmatpush1.bf16.msra.mxu0 %v649
    %659 = vmatprep.subr.bf16.mxu0 0
    %660 = vmatpush1.bf16.msra.mxu0 0
    %661 = vmatprep.subr.bf16.mxu0 0
    %662 = vmatpush1.bf16.msra.mxu0 0
    %663 = vmatprep.subr.bf16.mxu0 0
    %664 = vmatpush1.bf16.msra.mxu0 0
    %665 = vmatprep.subr.bf16.mxu0 0
    %666 = vmatpush1.bf16.msra.mxu0 0
    %667 = vmatprep.subr.bf16.mxu0 0
    %668 = vmatpush1.bf16.msra.mxu0 0
    %669 = vmatprep.subr.bf16.mxu0 0
    %670 = vmatpush1.bf16.msra.mxu0 0
    %671 = vmatprep.subr.bf16.mxu0 0
    %672 = vmatpush1.bf16.msra.mxu0 0
    %673 = vmatprep.subr.bf16.mxu0 0
    %674 = vmatpush1.bf16.msra.mxu0 0
    %675 = vmatprep.subr.bf16.mxu0 0
    %676 = vmatpush1.bf16.msra.mxu0 0
    %677 = vmatprep.subr.bf16.mxu0 0
    %678 = vmatpush1.bf16.msra.mxu0 0
    %679 = vmatprep.subr.bf16.mxu0 0
    %680 = vmatpush1.bf16.msra.mxu0 0
    %681 = vmatprep.subr.bf16.mxu0 0
    %682 = vmatpush1.bf16.msra.mxu0 0
    %683 = vmatprep.subr.bf16.mxu0 0
    %684 = vmatpush1.bf16.msra.mxu0 0
    %685 = vmatprep.subr.bf16.mxu0 0
    %686 = vmatpush1.bf16.msra.mxu0 0
    %687 = vmatprep.mubr.bf16.mxu0 0
    %688 = vmatmul.mubr.bf16.gmra.mrb[0].mxu0 %v653
    %v689 = vpop.f32.mrb[0].mxu0
    %v690 = vadd.f32 %v638, %v689
    %v691 = vpop.f32.mrb[0].mxu0
    %v692 = vpop.f32.mrb[0].mxu0
    %v693 = vadd.f32 %v638, %v692
    %v694 = vpop.f32.mrb[0].mxu0
    %695 = vdwg.mxu0
    %v696 = vadd.f32 %v125, %v690
    %v697 = vadd.f32 %v126, %v693
    %v698 = vld [vmem:[%s8] sm:$0x1]
    %v699 = vld [vmem:[%s9] sm:$0x1]
    %v700 = vsel %vm83, %v696, 0.0
    %701 = vadd.xlane.f32.xlu0 %v700
    %v702 = vpop.xlane.xlu0 %701
    %v703 = vsel %vm83, %v697, 0.0
    %704 = vadd.xlane.f32.xlu0 %v703
    %v705 = vpop.xlane.xlu0 %704
    %v706 = vmul.f32 %v702, %v90
    %v707 = vmul.f32 %v705, %v90
    %v708 = vsub.f32 %v696, %v706
    %v709 = vsub.f32 %v697, %v707
    %v710 = vmul.f32 %v708, %v708
    %v711 = vmul.f32 %v709, %v709
    %v712 = vsel %vm83, %v710, 0.0
    %713 = vadd.xlane.f32.xlu0 %v712
    %v714 = vpop.xlane.xlu0 %713
    %v715 = vsel %vm83, %v711, 0.0
    %716 = vadd.xlane.f32.xlu0 %v715
    %v717 = vpop.xlane.xlu0 %716
    %v718 = vmul.f32 %v714, %v90
    %v719 = vmul.f32 %v717, %v90
    %v720 = vadd.f32 %v718, 1e-12
    %v721 = vadd.f32 %v719, 1e-12
    %v722 = vrsqrt.pop %v720
    %v723 = vrsqrt.pop %v721
    %v724 = vmul.f32 %v708, %v722
    %v725 = vmul.f32 %v709, %v723
    %v727 = vlaneseq
    %v728 = vshrl.u32 %v727, 7
    %v729 = vsub.s32 0, %v728
    %v730 = vrot.slane %v698, %v729
    %v732 = vmul.f32 %v724, %v730
    %v733 = vmul.f32 %v725, %v730
    %v735 = vlaneseq
    %v736 = vshrl.u32 %v735, 7
    %v737 = vsub.s32 0, %v736
    %v738 = vrot.slane %v699, %v737
    %v740 = vadd.f32 %v732, %v738
    %v741 = vadd.f32 %v733, %v738
    %v742 = vld [vmem:[%s10] sm:$0xf]
    %v743 = vld [vmem:[%s10 + $0x4] sm:$0xf]
    %v744 = vld [vmem:[%s10 + $0x8] sm:$0xf]
    %v745 = vld [vmem:[%s10 + $0xc] sm:$0xf]
    %v746 = vld [vmem:[%s11] sm:$0x1]
    %v747 = vpack.c.bf16 %v741, %v740
    %v749 = vlaneseq
    %v750 = vshrl.u32 %v749, 7
    %v751 = vsub.s32 0, %v750
    %v752 = vrot.slane %v746, %v751
    %v758 = vunpack.c.l.b16 %v742
    %v759 = vunpack.c.l.b16 %v743
    %v760 = vunpack.c.l.b16 %v744
    %v761 = vunpack.c.l.b16 %v745
    %v762 = vpack.c.b16 %v759, %v758
    %v763 = vpack.c.b16 %v761, %v760
    %v767 = vsel %vm83, %v747, 0
    %769 = vmatprep.subr.bf16.mxu0 0
    %770 = vmatpush1.bf16.msra.mxu0 %v762
    %771 = vmatprep.subr.bf16.mxu0 0
    %772 = vmatpush1.bf16.msra.mxu0 %v763
    %773 = vmatprep.subr.bf16.mxu0 0
    %774 = vmatpush1.bf16.msra.mxu0 0
    %775 = vmatprep.subr.bf16.mxu0 0
    %776 = vmatpush1.bf16.msra.mxu0 0
    %777 = vmatprep.subr.bf16.mxu0 0
    %778 = vmatpush1.bf16.msra.mxu0 0
    %779 = vmatprep.subr.bf16.mxu0 0
    %780 = vmatpush1.bf16.msra.mxu0 0
    %781 = vmatprep.subr.bf16.mxu0 0
    %782 = vmatpush1.bf16.msra.mxu0 0
    %783 = vmatprep.subr.bf16.mxu0 0
    %784 = vmatpush1.bf16.msra.mxu0 0
    %785 = vmatprep.subr.bf16.mxu0 0
    %786 = vmatpush1.bf16.msra.mxu0 0
    %787 = vmatprep.subr.bf16.mxu0 0
    %788 = vmatpush1.bf16.msra.mxu0 0
    %789 = vmatprep.subr.bf16.mxu0 0
    %790 = vmatpush1.bf16.msra.mxu0 0
    %791 = vmatprep.subr.bf16.mxu0 0
    %792 = vmatpush1.bf16.msra.mxu0 0
    %793 = vmatprep.subr.bf16.mxu0 0
    %794 = vmatpush1.bf16.msra.mxu0 0
    %795 = vmatprep.subr.bf16.mxu0 0
    %796 = vmatpush1.bf16.msra.mxu0 0
    %797 = vmatprep.subr.bf16.mxu0 0
    %798 = vmatpush1.bf16.msra.mxu0 0
    %799 = vmatprep.subr.bf16.mxu0 0
    %800 = vmatpush1.bf16.msra.mxu0 0
    %801 = vmatprep.mubr.bf16.mxu0 0
    %802 = vmatmul.mubr.bf16.gmra.mrb[0].mxu0 %v767
    %v803 = vpop.f32.mrb[0].mxu0
    %v804 = vadd.f32 %v752, %v803
    %v805 = vpop.f32.mrb[0].mxu0
    %v806 = vpop.f32.mrb[0].mxu0
    %v807 = vadd.f32 %v752, %v806
    %v808 = vpop.f32.mrb[0].mxu0
    %809 = vdwg.mxu0
    %v810 = vmul.f32 %v804, 0.5
    %v811 = vmul.f32 %v807, 0.5
    %v812 = vmul.f32 %v804, 0.044715
    %v813 = vmul.f32 %v807, 0.044715
    %v814 = vmul.f32 %v812, %v804
    %v815 = vmul.f32 %v813, %v807
    %v816 = vmul.f32 %v814, %v804
    %v817 = vmul.f32 %v815, %v807
    %v818 = vadd.f32 %v804, %v816
    %v819 = vadd.f32 %v807, %v817
    %v820 = vmul.f32 %v818, 0.7978846
    %v821 = vmul.f32 %v819, 0.7978846
    %v822 = vtanh.pop %v820
    %v823 = vtanh.pop %v821
    %v824 = vadd.f32 %v822, 1.0
    %v825 = vadd.f32 %v823, 1.0
    %v826 = vmul.f32 %v810, %v824
    %v827 = vmul.f32 %v811, %v825
    %v828 = vld [vmem:[%s12] sm:$0xf]
    %v829 = vld [vmem:[%s12 + $0x4] sm:$0xf]
    %v830 = vld [vmem:[%s12 + $0x8] sm:$0xf]
    %v831 = vld [vmem:[%s12 + $0xc] sm:$0xf]
    %v832 = vld [vmem:[%s12 + $0x10] sm:$0xf]
    %v833 = vld [vmem:[%s12 + $0x14] sm:$0xf]
    %v834 = vld [vmem:[%s12 + $0x18] sm:$0xf]
    %v835 = vld [vmem:[%s12 + $0x1c] sm:$0xf]
    %v836 = vld [vmem:[%s12 + $0x20] sm:$0xf]
    %v837 = vld [vmem:[%s12 + $0x24] sm:$0xf]
    %v838 = vld [vmem:[%s12 + $0x28] sm:$0xf]
    %v839 = vld [vmem:[%s12 + $0x2c] sm:$0xf]
    %v840 = vld [vmem:[%s12 + $0x30] sm:$0xf]
    %v841 = vld [vmem:[%s12 + $0x34] sm:$0xf]
    %v842 = vld [vmem:[%s12 + $0x38] sm:$0xf]
    %v843 = vld [vmem:[%s12 + $0x3c] sm:$0xf]
    %v844 = vld [vmem:[%s13] sm:$0x1]
    %v845 = vpack.c.bf16 %v827, %v826
    %v847 = vlaneseq
    %v848 = vshrl.u32 %v847, 7
    %v849 = vsub.s32 0, %v848
    %v850 = vrot.slane %v844, %v849
    %v868 = vunpack.c.l.b16 %v828
    %v869 = vunpack.c.l.b16 %v829
    %v870 = vunpack.c.l.b16 %v830
    %v871 = vunpack.c.l.b16 %v831
    %v872 = vunpack.c.l.b16 %v832
    %v873 = vunpack.c.l.b16 %v833
    %v874 = vunpack.c.l.b16 %v834
    %v875 = vunpack.c.l.b16 %v835
    %v876 = vunpack.c.l.b16 %v836
    %v877 = vunpack.c.l.b16 %v837
    %v878 = vunpack.c.l.b16 %v838
    %v879 = vunpack.c.l.b16 %v839
    %v880 = vunpack.c.l.b16 %v840
    %v881 = vunpack.c.l.b16 %v841
    %v882 = vunpack.c.l.b16 %v842
    %v883 = vunpack.c.l.b16 %v843
    %v884 = vpack.c.b16 %v869, %v868
    %v885 = vpack.c.b16 %v871, %v870
    %v886 = vpack.c.b16 %v873, %v872
    %v887 = vpack.c.b16 %v875, %v874
    %v888 = vpack.c.b16 %v877, %v876
    %v889 = vpack.c.b16 %v879, %v878
    %v890 = vpack.c.b16 %v881, %v880
    %v891 = vpack.c.b16 %v883, %v882
    %900 = vmatprep.subr.bf16.mxu0 0
    %901 = vmatpush1.bf16.msra.mxu0 %v884
    %902 = vmatprep.subr.bf16.mxu0 0
    %903 = vmatpush1.bf16.msra.mxu0 %v885
    %904 = vmatprep.subr.bf16.mxu0 0
    %905 = vmatpush1.bf16.msra.mxu0 %v886
    %906 = vmatprep.subr.bf16.mxu0 0
    %907 = vmatpush1.bf16.msra.mxu0 %v887
    %908 = vmatprep.subr.bf16.mxu0 0
    %909 = vmatpush1.bf16.msra.mxu0 %v888
    %910 = vmatprep.subr.bf16.mxu0 0
    %911 = vmatpush1.bf16.msra.mxu0 %v889
    %912 = vmatprep.subr.bf16.mxu0 0
    %913 = vmatpush1.bf16.msra.mxu0 %v890
    %914 = vmatprep.subr.bf16.mxu0 0
    %915 = vmatpush1.bf16.msra.mxu0 %v891
    %916 = vmatprep.subr.bf16.mxu0 0
    %917 = vmatpush1.bf16.msra.mxu0 0
    %918 = vmatprep.subr.bf16.mxu0 0
    %919 = vmatpush1.bf16.msra.mxu0 0
    %920 = vmatprep.subr.bf16.mxu0 0
    %921 = vmatpush1.bf16.msra.mxu0 0
    %922 = vmatprep.subr.bf16.mxu0 0
    %923 = vmatpush1.bf16.msra.mxu0 0
    %924 = vmatprep.subr.bf16.mxu0 0
    %925 = vmatpush1.bf16.msra.mxu0 0
    %926 = vmatprep.subr.bf16.mxu0 0
    %927 = vmatpush1.bf16.msra.mxu0 0
    %928 = vmatprep.subr.bf16.mxu0 0
    %929 = vmatpush1.bf16.msra.mxu0 0
    %930 = vmatprep.subr.bf16.mxu0 0
    %931 = vmatpush1.bf16.msra.mxu0 0
    %932 = vmatprep.mubr.bf16.mxu0 0
    %933 = vmatmul.mubr.bf16.gmra.mrb[0].mxu0 %v845
    %v934 = vpop.f32.mrb[0].mxu0
    %v935 = vadd.f32 %v850, %v934
    %v936 = vpop.f32.mrb[0].mxu0
    %v937 = vpop.f32.mrb[0].mxu0
    %v938 = vadd.f32 %v850, %v937
    %v939 = vpop.f32.mrb[0].mxu0
    %940 = vdwg.mxu0
    %v941 = vadd.f32 %v740, %v935
    %v942 = vadd.f32 %v741, %v938
    %v943 = vld [vmem:[%s14] sm:$0x1]
    %v944 = vld [vmem:[%s15] sm:$0x1]
    %v945 = vsel %vm83, %v941, 0.0
    %946 = vadd.xlane.f32.xlu0 %v945
    %v947 = vpop.xlane.xlu0 %946
    %v948 = vsel %vm83, %v942, 0.0
    %949 = vadd.xlane.f32.xlu0 %v948
    %v950 = vpop.xlane.xlu0 %949
    %v951 = vmul.f32 %v947, %v90
    %v952 = vmul.f32 %v950, %v90
    %v953 = vsub.f32 %v941, %v951
    %v954 = vsub.f32 %v942, %v952
    %v955 = vmul.f32 %v953, %v953
    %v956 = vmul.f32 %v954, %v954
    %v957 = vsel %vm83, %v955, 0.0
    %958 = vadd.xlane.f32.xlu0 %v957
    %v959 = vpop.xlane.xlu0 %958
    %v960 = vsel %vm83, %v956, 0.0
    %961 = vadd.xlane.f32.xlu0 %v960
    %v962 = vpop.xlane.xlu0 %961
    %v963 = vmul.f32 %v959, %v90
    %v964 = vmul.f32 %v962, %v90
    %v965 = vadd.f32 %v963, 1e-12
    %v966 = vadd.f32 %v964, 1e-12
    %v967 = vrsqrt.pop %v965
    %v968 = vrsqrt.pop %v966
    %v969 = vmul.f32 %v953, %v967
    %v970 = vmul.f32 %v954, %v968
    %v972 = vlaneseq
    %v973 = vshrl.u32 %v972, 7
    %v974 = vsub.s32 0, %v973
    %v975 = vrot.slane %v943, %v974
    %v977 = vmul.f32 %v969, %v975
    %v978 = vmul.f32 %v970, %v975
    %v980 = vlaneseq
    %v981 = vshrl.u32 %v980, 7
    %v982 = vsub.s32 0, %v981
    %v983 = vrot.slane %v944, %v982
    %v985 = vadd.f32 %v977, %v983
    %v986 = vadd.f32 %v978, %v983
    %s987 = scalar_lea.vmem %s4, 16
    %v988 = vld [vmem:[%s987] sm:$0xf]
    %v989 = vld [vmem:[%s987 + $0x4] sm:$0xf]
    %v990 = vld [vmem:[%s987 + $0x8] sm:$0xf]
    %v991 = vld [vmem:[%s987 + $0xc] sm:$0xf]
    %s992 = scalar_lea.vmem %s5, 1
    %v993 = vld [vmem:[%s992] sm:$0x1]
    %v994 = vpack.c.bf16 %v986, %v985
    %v996 = vlaneseq
    %v997 = vshrl.u32 %v996, 7
    %v998 = vsub.s32 0, %v997
    %v999 = vrot.slane %v993, %v998
    %v1005 = vunpack.c.l.b16 %v988
    %v1006 = vunpack.c.l.b16 %v989
    %v1007 = vunpack.c.l.b16 %v990
    %v1008 = vunpack.c.l.b16 %v991
    %v1009 = vpack.c.b16 %v1006, %v1005
    %v1010 = vpack.c.b16 %v1008, %v1007
    %v1014 = vsel %vm83, %v994, 0
    %1016 = vmatprep.subr.bf16.mxu0 0
    %1017 = vmatpush1.bf16.msra.mxu0 %v1009
    %1018 = vmatprep.subr.bf16.mxu0 0
    %1019 = vmatpush1.bf16.msra.mxu0 %v1010
    %1020 = vmatprep.subr.bf16.mxu0 0
    %1021 = vmatpush1.bf16.msra.mxu0 0
    %1022 = vmatprep.subr.bf16.mxu0 0
    %1023 = vmatpush1.bf16.msra.mxu0 0
    %1024 = vmatprep.subr.bf16.mxu0 0
    %1025 = vmatpush1.bf16.msra.mxu0 0
    %1026 = vmatprep.subr.bf16.mxu0 0
    %1027 = vmatpush1.bf16.msra.mxu0 0
    %1028 = vmatprep.subr.bf16.mxu0 0
    %1029 = vmatpush1.bf16.msra.mxu0 0
    %1030 = vmatprep.subr.bf16.mxu0 0
    %1031 = vmatpush1.bf16.msra.mxu0 0
    %1032 = vmatprep.subr.bf16.mxu0 0
    %1033 = vmatpush1.bf16.msra.mxu0 0
    %1034 = vmatprep.subr.bf16.mxu0 0
    %1035 = vmatpush1.bf16.msra.mxu0 0
    %1036 = vmatprep.subr.bf16.mxu0 0
    %1037 = vmatpush1.bf16.msra.mxu0 0
    %1038 = vmatprep.subr.bf16.mxu0 0
    %1039 = vmatpush1.bf16.msra.mxu0 0
    %1040 = vmatprep.subr.bf16.mxu0 0
    %1041 = vmatpush1.bf16.msra.mxu0 0
    %1042 = vmatprep.subr.bf16.mxu0 0
    %1043 = vmatpush1.bf16.msra.mxu0 0
    %1044 = vmatprep.subr.bf16.mxu0 0
    %1045 = vmatpush1.bf16.msra.mxu0 0
    %1046 = vmatprep.subr.bf16.mxu0 0
    %1047 = vmatpush1.bf16.msra.mxu0 0
    %1048 = vmatprep.mubr.bf16.mxu0 0
    %1049 = vmatmul.mubr.bf16.gmra.mrb[0].mxu0 %v1014
    %v1050 = vpop.f32.mrb[0].mxu0
    %v1051 = vadd.f32 %v999, %v1050
    %v1052 = vpop.f32.mrb[0].mxu0
    %v1053 = vpop.f32.mrb[0].mxu0
    %v1054 = vadd.f32 %v999, %v1053
    %v1055 = vpop.f32.mrb[0].mxu0
    %1056 = vdwg.mxu0
    %v1057 = vmul.f32 %v1051, %v135
    %v1058 = vmul.f32 %v1054, %v135
    %1061 = vrot.lane.b32.xlu0 %v1051, 96
    %v1062 = vpop.permute.xlu0 %1061
    %1063 = vrot.lane.b32.xlu0 %v1054, 96
    %v1064 = vpop.permute.xlu0 %1063
    %v1066 = vsel %vm83, %v1057, 0
    %v1069 = vsel %vm83, %v1058, 0
    %v1071 = vsel %vm83, %v1062, 0
    %v1073 = vsel %vm83, %v1064, 0
    %1075 = vmatprep.subr.mxu0 0.0
    %1076 = vmatpush1.xpose.msra.mxu0 %v1071
    %1077 = vmatprep.subr.mxu0 0.0
    %1078 = vmatpush1.xpose.msra.mxu0 %v1073
    %1079 = vmatprep.subr.mxu0 0.0
    %1080 = vmatpush1.xpose.msra.mxu0 0.0
    %1081 = vmatprep.subr.mxu0 0.0
    %1082 = vmatpush1.xpose.msra.mxu0 0.0
    %1083 = vmatprep.subr.mxu0 0.0
    %1084 = vmatpush1.xpose.msra.mxu0 0.0
    %1085 = vmatprep.subr.mxu0 0.0
    %1086 = vmatpush1.xpose.msra.mxu0 0.0
    %1087 = vmatprep.subr.mxu0 0.0
    %1088 = vmatpush1.xpose.msra.mxu0 0.0
    %1089 = vmatprep.subr.mxu0 0.0
    %1090 = vmatpush1.xpose.msra.mxu0 0.0
    %1091 = vmatprep.subr.mxu0 0.0
    %1092 = vmatpush1.xpose.msra.mxu0 0.0
    %1093 = vmatprep.subr.mxu0 0.0
    %1094 = vmatpush1.xpose.msra.mxu0 0.0
    %1095 = vmatprep.subr.mxu0 0.0
    %1096 = vmatpush1.xpose.msra.mxu0 0.0
    %1097 = vmatprep.subr.mxu0 0.0
    %1098 = vmatpush1.xpose.msra.mxu0 0.0
    %1099 = vmatprep.subr.mxu0 0.0
    %1100 = vmatpush1.xpose.msra.mxu0 0.0
    %1101 = vmatprep.subr.mxu0 0.0
    %1102 = vmatpush1.xpose.msra.mxu0 0.0
    %1103 = vmatprep.subr.mxu0 0.0
    %1104 = vmatpush1.xpose.msra.mxu0 0.0
    %1105 = vmatprep.subr.mxu0 0.0
    %1106 = vmatpush1.xpose.msra.mxu0 0.0
    %1107 = vmatprep.subr.mxu0 0.0
    %1108 = vmatpush1.xpose.msra.mxu0 0.0
    %1109 = vmatprep.subr.mxu0 0.0
    %1110 = vmatpush1.xpose.msra.mxu0 0.0
    %1111 = vmatprep.subr.mxu0 0.0
    %1112 = vmatpush1.xpose.msra.mxu0 0.0
    %1113 = vmatprep.subr.mxu0 0.0
    %1114 = vmatpush1.xpose.msra.mxu0 0.0
    %1115 = vmatprep.subr.mxu0 0.0
    %1116 = vmatpush1.xpose.msra.mxu0 0.0
    %1117 = vmatprep.subr.mxu0 0.0
    %1118 = vmatpush1.xpose.msra.mxu0 0.0
    %1119 = vmatprep.subr.mxu0 0.0
    %1120 = vmatpush1.xpose.msra.mxu0 0.0
    %1121 = vmatprep.subr.mxu0 0.0
    %1122 = vmatpush1.xpose.msra.mxu0 0.0
    %1123 = vmatprep.subr.mxu0 0.0
    %1124 = vmatpush1.xpose.msra.mxu0 0.0
    %1125 = vmatprep.subr.mxu0 0.0
    %1126 = vmatpush1.xpose.msra.mxu0 0.0
    %1127 = vmatprep.subr.mxu0 0.0
    %1128 = vmatpush1.xpose.msra.mxu0 0.0
    %1129 = vmatprep.subr.mxu0 0.0
    %1130 = vmatpush1.xpose.msra.mxu0 0.0
    %1131 = vmatprep.subr.mxu0 0.0
    %1132 = vmatpush1.xpose.msra.mxu0 0.0
    %1133 = vmatprep.subr.mxu0 0.0
    %1134 = vmatpush1.xpose.msra.mxu0 0.0
    %1135 = vmatprep.subr.mxu0 0.0
    %1136 = vmatpush1.xpose.msra.mxu0 0.0
    %1137 = vmatprep.subr.mxu0 0.0
    %1138 = vmatpush1.xpose.msra.mxu0 0.0
    %1139 = vmatprep.mubr.f32.mxu0 0.0
    %1140 = vmatmul.mubr.f32.gmra.mrb[0].mxu0 %v1066
    %v1141 = vpop.f32.mrb[0].mxu0
    %v1142 = vadd.f32 0.0, %v1141
    %v1143 = vpop.f32.mrb[0].mxu0
    %1144 = vmatprep.mubr.f32.mxu0 0.0
    %1145 = vmatmul.mubr.f32.gmra.mrb[0].mxu0 %v1069
    %v1146 = vpop.f32.mrb[0].mxu0
    %v1147 = vadd.f32 0.0, %v1146
    %v1148 = vpop.f32.mrb[0].mxu0
    %1149 = vdwg.mxu0
    %v1150 = vmul.f32 %v1142, 0.25
    %v1151 = vmul.f32 %v1147, 0.25
    %v1152 = vadd.f32 %v1150, %v127
    %v1153 = vadd.f32 %v1151, %v128
    %v1154 = vsel %vm306, %v1152, -inf
    %1155 = vmax.xlane.f32.xlu0 %v1154
    %v1156 = vpop.xlane.xlu0 %1155
    %v1157 = vsel %vm306, %v1153, -inf
    %1158 = vmax.xlane.f32.xlu0 %v1157
    %v1159 = vpop.xlane.xlu0 %1158
    %v1160 = vsub.f32 %v1152, %v1156
    %v1161 = vsub.f32 %v1153, %v1159
    %v1162 = vmul.f32 %v1160, 1.442695
    %v1163 = vpow.pop %v1162
    %v1164 = vmul.f32 %v1161, 1.442695
    %v1165 = vpow.pop %v1164
    %v1166 = vsel %vm306, %v1163, 0.0
    %1167 = vadd.xlane.f32.xlu0 %v1166
    %v1168 = vpop.xlane.xlu0 %1167
    %v1169 = vsel %vm306, %v1165, 0.0
    %1170 = vadd.xlane.f32.xlu0 %v1169
    %v1171 = vpop.xlane.xlu0 %1170
    %v1172 = vrcp.pop %v1168
    %v1173 = vrcp.pop %v1171
    %v1174 = vmul.f32 %v1163, %v1172
    %v1175 = vmul.f32 %v1165, %v1173
    %v1176 = vmul.f32 %v1051, %v331
    %v1177 = vmul.f32 %v1054, %v331
    %v1178 = vmul.f32 %v1051, %v140
    %v1179 = vmul.f32 %v1054, %v140
    %v1181 = vsel %vm83, %v1178, 0
    %v1184 = vsel %vm83, %v1179, 0
    %1186 = vmatprep.subr.mxu0 0.0
    %1187 = vmatpush1.xpose.msra.mxu0 %v1071
    %1188 = vmatprep.subr.mxu0 0.0
    %1189 = vmatpush1.xpose.msra.mxu0 %v1073
    %1190 = vmatprep.subr.mxu0 0.0
    %1191 = vmatpush1.xpose.msra.mxu0 0.0
    %1192 = vmatprep.subr.mxu0 0.0
    %1193 = vmatpush1.xpose.msra.mxu0 0.0
    %1194 = vmatprep.subr.mxu0 0.0
    %1195 = vmatpush1.xpose.msra.mxu0 0.0
    %1196 = vmatprep.subr.mxu0 0.0
    %1197 = vmatpush1.xpose.msra.mxu0 0.0
    %1198 = vmatprep.subr.mxu0 0.0
    %1199 = vmatpush1.xpose.msra.mxu0 0.0
    %1200 = vmatprep.subr.mxu0 0.0
    %1201 = vmatpush1.xpose.msra.mxu0 0.0
    %1202 = vmatprep.subr.mxu0 0.0
    %1203 = vmatpush1.xpose.msra.mxu0 0.0
    %1204 = vmatprep.subr.mxu0 0.0
    %1205 = vmatpush1.xpose.msra.mxu0 0.0
    %1206 = vmatprep.subr.mxu0 0.0
    %1207 = vmatpush1.xpose.msra.mxu0 0.0
    %1208 = vmatprep.subr.mxu0 0.0
    %1209 = vmatpush1.xpose.msra.mxu0 0.0
    %1210 = vmatprep.subr.mxu0 0.0
    %1211 = vmatpush1.xpose.msra.mxu0 0.0
    %1212 = vmatprep.subr.mxu0 0.0
    %1213 = vmatpush1.xpose.msra.mxu0 0.0
    %1214 = vmatprep.subr.mxu0 0.0
    %1215 = vmatpush1.xpose.msra.mxu0 0.0
    %1216 = vmatprep.subr.mxu0 0.0
    %1217 = vmatpush1.xpose.msra.mxu0 0.0
    %1218 = vmatprep.subr.mxu0 0.0
    %1219 = vmatpush1.xpose.msra.mxu0 0.0
    %1220 = vmatprep.subr.mxu0 0.0
    %1221 = vmatpush1.xpose.msra.mxu0 0.0
    %1222 = vmatprep.subr.mxu0 0.0
    %1223 = vmatpush1.xpose.msra.mxu0 0.0
    %1224 = vmatprep.subr.mxu0 0.0
    %1225 = vmatpush1.xpose.msra.mxu0 0.0
    %1226 = vmatprep.subr.mxu0 0.0
    %1227 = vmatpush1.xpose.msra.mxu0 0.0
    %1228 = vmatprep.subr.mxu0 0.0
    %1229 = vmatpush1.xpose.msra.mxu0 0.0
    %1230 = vmatprep.subr.mxu0 0.0
    %1231 = vmatpush1.xpose.msra.mxu0 0.0
    %1232 = vmatprep.subr.mxu0 0.0
    %1233 = vmatpush1.xpose.msra.mxu0 0.0
    %1234 = vmatprep.subr.mxu0 0.0
    %1235 = vmatpush1.xpose.msra.mxu0 0.0
    %1236 = vmatprep.subr.mxu0 0.0
    %1237 = vmatpush1.xpose.msra.mxu0 0.0
    %1238 = vmatprep.subr.mxu0 0.0
    %1239 = vmatpush1.xpose.msra.mxu0 0.0
    %1240 = vmatprep.subr.mxu0 0.0
    %1241 = vmatpush1.xpose.msra.mxu0 0.0
    %1242 = vmatprep.subr.mxu0 0.0
    %1243 = vmatpush1.xpose.msra.mxu0 0.0
    %1244 = vmatprep.subr.mxu0 0.0
    %1245 = vmatpush1.xpose.msra.mxu0 0.0
    %1246 = vmatprep.subr.mxu0 0.0
    %1247 = vmatpush1.xpose.msra.mxu0 0.0
    %1248 = vmatprep.subr.mxu0 0.0
    %1249 = vmatpush1.xpose.msra.mxu0 0.0
    %1250 = vmatprep.mubr.f32.mxu0 0.0
    %1251 = vmatmul.mubr.f32.gmra.mrb[0].mxu0 %v1181
    %v1252 = vpop.f32.mrb[0].mxu0
    %v1253 = vadd.f32 0.0, %v1252
    %v1254 = vpop.f32.mrb[0].mxu0
    %1255 = vmatprep.mubr.f32.mxu0 0.0
    %1256 = vmatmul.mubr.f32.gmra.mrb[0].mxu0 %v1184
    %v1257 = vpop.f32.mrb[0].mxu0
    %v1258 = vadd.f32 0.0, %v1257
    %v1259 = vpop.f32.mrb[0].mxu0
    %1260 = vdwg.mxu0
    %v1261 = vmul.f32 %v1253, 0.25
    %v1262 = vmul.f32 %v1258, 0.25
    %v1263 = vadd.f32 %v1261, %v127
    %v1264 = vadd.f32 %v1262, %v128
    %v1265 = vsel %vm306, %v1263, -inf
    %1266 = vmax.xlane.f32.xlu0 %v1265
    %v1267 = vpop.xlane.xlu0 %1266
    %v1268 = vsel %vm306, %v1264, -inf
    %1269 = vmax.xlane.f32.xlu0 %v1268
    %v1270 = vpop.xlane.xlu0 %1269
    %v1271 = vsub.f32 %v1263, %v1267
    %v1272 = vsub.f32 %v1264, %v1270
    %v1273 = vmul.f32 %v1271, 1.442695
    %v1274 = vpow.pop %v1273
    %v1275 = vmul.f32 %v1272, 1.442695
    %v1276 = vpow.pop %v1275
    %v1277 = vsel %vm306, %v1274, 0.0
    %1278 = vadd.xlane.f32.xlu0 %v1277
    %v1279 = vpop.xlane.xlu0 %1278
    %v1280 = vsel %vm306, %v1276, 0.0
    %1281 = vadd.xlane.f32.xlu0 %v1280
    %v1282 = vpop.xlane.xlu0 %1281
    %v1283 = vrcp.pop %v1279
    %v1284 = vrcp.pop %v1282
    %v1285 = vmul.f32 %v1274, %v1283
    %v1286 = vmul.f32 %v1276, %v1284
    %v1287 = vmul.f32 %v1051, %v446
    %v1288 = vmul.f32 %v1054, %v446
    %1291 = vrot.lane.b32.xlu0 %v1287, 64
    %v1292 = vpop.permute.xlu0 %1291
    %1293 = vrot.lane.b32.xlu0 %v1288, 64
    %v1294 = vpop.permute.xlu0 %1293
    %v1298 = vsel %vm306, %v1285, 0
    %v1301 = vsel %vm306, %v1286, 0
    %1303 = vmatprep.subr.mxu0 0.0
    %1304 = vmatpush1.msra.mxu0 %v1292
    %1305 = vmatprep.subr.mxu0 0.0
    %1306 = vmatpush1.msra.mxu0 %v1294
    %1307 = vmatprep.subr.mxu0 0.0
    %1308 = vmatpush1.msra.mxu0 0.0
    %1309 = vmatprep.subr.mxu0 0.0
    %1310 = vmatpush1.msra.mxu0 0.0
    %1311 = vmatprep.subr.mxu0 0.0
    %1312 = vmatpush1.msra.mxu0 0.0
    %1313 = vmatprep.subr.mxu0 0.0
    %1314 = vmatpush1.msra.mxu0 0.0
    %1315 = vmatprep.subr.mxu0 0.0
    %1316 = vmatpush1.msra.mxu0 0.0
    %1317 = vmatprep.subr.mxu0 0.0
    %1318 = vmatpush1.msra.mxu0 0.0
    %1319 = vmatprep.subr.mxu0 0.0
    %1320 = vmatpush1.msra.mxu0 0.0
    %1321 = vmatprep.subr.mxu0 0.0
    %1322 = vmatpush1.msra.mxu0 0.0
    %1323 = vmatprep.subr.mxu0 0.0
    %1324 = vmatpush1.msra.mxu0 0.0
    %1325 = vmatprep.subr.mxu0 0.0
    %1326 = vmatpush1.msra.mxu0 0.0
    %1327 = vmatprep.subr.mxu0 0.0
    %1328 = vmatpush1.msra.mxu0 0.0
    %1329 = vmatprep.subr.mxu0 0.0
    %1330 = vmatpush1.msra.mxu0 0.0
    %1331 = vmatprep.subr.mxu0 0.0
    %1332 = vmatpush1.msra.mxu0 0.0
    %1333 = vmatprep.subr.mxu0 0.0
    %1334 = vmatpush1.msra.mxu0 0.0
    %1335 = vmatprep.subr.mxu0 0.0
    %1336 = vmatpush1.msra.mxu0 0.0
    %1337 = vmatprep.subr.mxu0 0.0
    %1338 = vmatpush1.msra.mxu0 0.0
    %1339 = vmatprep.subr.mxu0 0.0
    %1340 = vmatpush1.msra.mxu0 0.0
    %1341 = vmatprep.subr.mxu0 0.0
    %1342 = vmatpush1.msra.mxu0 0.0
    %1343 = vmatprep.subr.mxu0 0.0
    %1344 = vmatpush1.msra.mxu0 0.0
    %1345 = vmatprep.subr.mxu0 0.0
    %1346 = vmatpush1.msra.mxu0 0.0
    %1347 = vmatprep.subr.mxu0 0.0
    %1348 = vmatpush1.msra.mxu0 0.0
    %1349 = vmatprep.subr.mxu0 0.0
    %1350 = vmatpush1.msra.mxu0 0.0
    %1351 = vmatprep.subr.mxu0 0.0
    %1352 = vmatpush1.msra.mxu0 0.0
    %1353 = vmatprep.subr.mxu0 0.0
    %1354 = vmatpush1.msra.mxu0 0.0
    %1355 = vmatprep.subr.mxu0 0.0
    %1356 = vmatpush1.msra.mxu0 0.0
    %1357 = vmatprep.subr.mxu0 0.0
    %1358 = vmatpush1.msra.mxu0 0.0
    %1359 = vmatprep.subr.mxu0 0.0
    %1360 = vmatpush1.msra.mxu0 0.0
    %1361 = vmatprep.subr.mxu0 0.0
    %1362 = vmatpush1.msra.mxu0 0.0
    %1363 = vmatprep.subr.mxu0 0.0
    %1364 = vmatpush1.msra.mxu0 0.0
    %1365 = vmatprep.subr.mxu0 0.0
    %1366 = vmatpush1.msra.mxu0 0.0
    %1367 = vmatprep.mubr.f32.mxu0 0.0
    %1368 = vmatmul.mubr.f32.gmra.mrb[0].mxu0 %v1298
    %v1369 = vpop.f32.mrb[0].mxu0
    %v1370 = vadd.f32 0.0, %v1369
    %v1371 = vpop.f32.mrb[0].mxu0
    %1372 = vmatprep.mubr.f32.mxu0 0.0
    %1373 = vmatmul.mubr.f32.gmra.mrb[0].mxu0 %v1301
    %v1374 = vpop.f32.mrb[0].mxu0
    %v1375 = vadd.f32 0.0, %v1374
    %v1376 = vpop.f32.mrb[0].mxu0
    %1377 = vdwg.mxu0
    %1380 = vrot.lane.b32.xlu0 %v1176, 64
    %v1381 = vpop.permute.xlu0 %1380
    %1382 = vrot.lane.b32.xlu0 %v1177, 64
    %v1383 = vpop.permute.xlu0 %1382
    %v1387 = vsel %vm306, %v1174, 0
    %v1390 = vsel %vm306, %v1175, 0
    %1392 = vmatprep.subr.mxu0 0.0
    %1393 = vmatpush1.msra.mxu0 %v1381
    %1394 = vmatprep.subr.mxu0 0.0
    %1395 = vmatpush1.msra.mxu0 %v1383
    %1396 = vmatprep.subr.mxu0 0.0
    %1397 = vmatpush1.msra.mxu0 0.0
    %1398 = vmatprep.subr.mxu0 0.0
    %1399 = vmatpush1.msra.mxu0 0.0
    %1400 = vmatprep.subr.mxu0 0.0
    %1401 = vmatpush1.msra.mxu0 0.0
    %1402 = vmatprep.subr.mxu0 0.0
    %1403 = vmatpush1.msra.mxu0 0.0
    %1404 = vmatprep.subr.mxu0 0.0
    %1405 = vmatpush1.msra.mxu0 0.0
    %1406 = vmatprep.subr.mxu0 0.0
    %1407 = vmatpush1.msra.mxu0 0.0
    %1408 = vmatprep.subr.mxu0 0.0
    %1409 = vmatpush1.msra.mxu0 0.0
    %1410 = vmatprep.subr.mxu0 0.0
    %1411 = vmatpush1.msra.mxu0 0.0
    %1412 = vmatprep.subr.mxu0 0.0
    %1413 = vmatpush1.msra.mxu0 0.0
    %1414 = vmatprep.subr.mxu0 0.0
    %1415 = vmatpush1.msra.mxu0 0.0
    %1416 = vmatprep.subr.mxu0 0.0
    %1417 = vmatpush1.msra.mxu0 0.0
    %1418 = vmatprep.subr.mxu0 0.0
    %1419 = vmatpush1.msra.mxu0 0.0
    %1420 = vmatprep.subr.mxu0 0.0
    %1421 = vmatpush1.msra.mxu0 0.0
    %1422 = vmatprep.subr.mxu0 0.0
    %1423 = vmatpush1.msra.mxu0 0.0
    %1424 = vmatprep.subr.mxu0 0.0
    %1425 = vmatpush1.msra.mxu0 0.0
    %1426 = vmatprep.subr.mxu0 0.0
    %1427 = vmatpush1.msra.mxu0 0.0
    %1428 = vmatprep.subr.mxu0 0.0
    %1429 = vmatpush1.msra.mxu0 0.0
    %1430 = vmatprep.subr.mxu0 0.0
    %1431 = vmatpush1.msra.mxu0 0.0
    %1432 = vmatprep.subr.mxu0 0.0
    %1433 = vmatpush1.msra.mxu0 0.0
    %1434 = vmatprep.subr.mxu0 0.0
    %1435 = vmatpush1.msra.mxu0 0.0
    %1436 = vmatprep.subr.mxu0 0.0
    %1437 = vmatpush1.msra.mxu0 0.0
    %1438 = vmatprep.subr.mxu0 0.0
    %1439 = vmatpush1.msra.mxu0 0.0
    %1440 = vmatprep.subr.mxu0 0.0
    %1441 = vmatpush1.msra.mxu0 0.0
    %1442 = vmatprep.subr.mxu0 0.0
    %1443 = vmatpush1.msra.mxu0 0.0
    %1444 = vmatprep.subr.mxu0 0.0
    %1445 = vmatpush1.msra.mxu0 0.0
    %1446 = vmatprep.subr.mxu0 0.0
    %1447 = vmatpush1.msra.mxu0 0.0
    %1448 = vmatprep.subr.mxu0 0.0
    %1449 = vmatpush1.msra.mxu0 0.0
    %1450 = vmatprep.subr.mxu0 0.0
    %1451 = vmatpush1.msra.mxu0 0.0
    %1452 = vmatprep.subr.mxu0 0.0
    %1453 = vmatpush1.msra.mxu0 0.0
    %1454 = vmatprep.subr.mxu0 0.0
    %1455 = vmatpush1.msra.mxu0 0.0
    %1456 = vmatprep.mubr.f32.mxu0 0.0
    %1457 = vmatmul.mubr.f32.gmra.mrb[0].mxu0 %v1387
    %v1458 = vpop.f32.mrb[0].mxu0
    %v1459 = vadd.f32 %v1370, %v1458
    %v1460 = vpop.f32.mrb[0].mxu0
    %1461 = vmatprep.mubr.f32.mxu0 0.0
    %1462 = vmatmul.mubr.f32.gmra.mrb[0].mxu0 %v1390
    %v1463 = vpop.f32.mrb[0].mxu0
    %v1464 = vadd.f32 %v1375, %v1463
    %v1465 = vpop.f32.mrb[0].mxu0
    %1466 = vdwg.mxu0
    %s1467 = scalar_lea.vmem %s6, 16
    %v1468 = vld [vmem:[%s1467] sm:$0xf]
    %v1469 = vld [vmem:[%s1467 + $0x4] sm:$0xf]
    %v1470 = vld [vmem:[%s1467 + $0x8] sm:$0xf]
    %v1471 = vld [vmem:[%s1467 + $0xc] sm:$0xf]
    %s1472 = scalar_lea.vmem %s7, 1
    %v1473 = vld [vmem:[%s1472] sm:$0x1]
    %v1474 = vpack.c.bf16 %v1464, %v1459
    %v1476 = vlaneseq
    %v1477 = vshrl.u32 %v1476, 7
    %v1478 = vsub.s32 0, %v1477
    %v1479 = vrot.slane %v1473, %v1478
    %v1485 = vunpack.c.l.b16 %v1468
    %v1486 = vunpack.c.l.b16 %v1469
    %v1487 = vunpack.c.l.b16 %v1470
    %v1488 = vunpack.c.l.b16 %v1471
    %v1489 = vpack.c.b16 %v1486, %v1485
    %v1490 = vpack.c.b16 %v1488, %v1487
    %v1494 = vsel %vm83, %v1474, 0
    %1496 = vmatprep.subr.bf16.mxu0 0
    %1497 = vmatpush1.bf16.msra.mxu0 %v1489
    %1498 = vmatprep.subr.bf16.mxu0 0
    %1499 = vmatpush1.bf16.msra.mxu0 %v1490
    %1500 = vmatprep.subr.bf16.mxu0 0
    %1501 = vmatpush1.bf16.msra.mxu0 0
    %1502 = vmatprep.subr.bf16.mxu0 0
    %1503 = vmatpush1.bf16.msra.mxu0 0
    %1504 = vmatprep.subr.bf16.mxu0 0
    %1505 = vmatpush1.bf16.msra.mxu0 0
    %1506 = vmatprep.subr.bf16.mxu0 0
    %1507 = vmatpush1.bf16.msra.mxu0 0
    %1508 = vmatprep.subr.bf16.mxu0 0
    %1509 = vmatpush1.bf16.msra.mxu0 0
    %1510 = vmatprep.subr.bf16.mxu0 0
    %1511 = vmatpush1.bf16.msra.mxu0 0
    %1512 = vmatprep.subr.bf16.mxu0 0
    %1513 = vmatpush1.bf16.msra.mxu0 0
    %1514 = vmatprep.subr.bf16.mxu0 0
    %1515 = vmatpush1.bf16.msra.mxu0 0
    %1516 = vmatprep.subr.bf16.mxu0 0
    %1517 = vmatpush1.bf16.msra.mxu0 0
    %1518 = vmatprep.subr.bf16.mxu0 0
    %1519 = vmatpush1.bf16.msra.mxu0 0
    %1520 = vmatprep.subr.bf16.mxu0 0
    %1521 = vmatpush1.bf16.msra.mxu0 0
    %1522 = vmatprep.subr.bf16.mxu0 0
    %1523 = vmatpush1.bf16.msra.mxu0 0
    %1524 = vmatprep.subr.bf16.mxu0 0
    %1525 = vmatpush1.bf16.msra.mxu0 0
    %1526 = vmatprep.subr.bf16.mxu0 0
    %1527 = vmatpush1.bf16.msra.mxu0 0
    %1528 = vmatprep.mubr.bf16.mxu0 0
    %1529 = vmatmul.mubr.bf16.gmra.mrb[0].mxu0 %v1494
    %v1530 = vpop.f32.mrb[0].mxu0
    %v1531 = vadd.f32 %v1479, %v1530
    %v1532 = vpop.f32.mrb[0].mxu0
    %v1533 = vpop.f32.mrb[0].mxu0
    %v1534 = vadd.f32 %v1479, %v1533
    %v1535 = vpop.f32.mrb[0].mxu0
    %1536 = vdwg.mxu0
    %v1537 = vadd.f32 %v985, %v1531
    %v1538 = vadd.f32 %v986, %v1534
    %s1539 = scalar_lea.vmem %s8, 1
    %v1540 = vld [vmem:[%s1539] sm:$0x1]
    %s1541 = scalar_lea.vmem %s9, 1
    %v1542 = vld [vmem:[%s1541] sm:$0x1]
    %v1543 = vsel %vm83, %v1537, 0.0
    %1544 = vadd.xlane.f32.xlu0 %v1543
    %v1545 = vpop.xlane.xlu0 %1544
    %v1546 = vsel %vm83, %v1538, 0.0
    %1547 = vadd.xlane.f32.xlu0 %v1546
    %v1548 = vpop.xlane.xlu0 %1547
    %v1549 = vmul.f32 %v1545, %v90
    %v1550 = vmul.f32 %v1548, %v90
    %v1551 = vsub.f32 %v1537, %v1549
    %v1552 = vsub.f32 %v1538, %v1550
    %v1553 = vmul.f32 %v1551, %v1551
    %v1554 = vmul.f32 %v1552, %v1552
    %v1555 = vsel %vm83, %v1553, 0.0
    %1556 = vadd.xlane.f32.xlu0 %v1555
    %v1557 = vpop.xlane.xlu0 %1556
    %v1558 = vsel %vm83, %v1554, 0.0
    %1559 = vadd.xlane.f32.xlu0 %v1558
    %v1560 = vpop.xlane.xlu0 %1559
    %v1561 = vmul.f32 %v1557, %v90
    %v1562 = vmul.f32 %v1560, %v90
    %v1563 = vadd.f32 %v1561, 1e-12
    %v1564 = vadd.f32 %v1562, 1e-12
    %v1565 = vrsqrt.pop %v1563
    %v1566 = vrsqrt.pop %v1564
    %v1567 = vmul.f32 %v1551, %v1565
    %v1568 = vmul.f32 %v1552, %v1566
    %v1570 = vlaneseq
    %v1571 = vshrl.u32 %v1570, 7
    %v1572 = vsub.s32 0, %v1571
    %v1573 = vrot.slane %v1540, %v1572
    %v1575 = vmul.f32 %v1567, %v1573
    %v1576 = vmul.f32 %v1568, %v1573
    %v1578 = vlaneseq
    %v1579 = vshrl.u32 %v1578, 7
    %v1580 = vsub.s32 0, %v1579
    %v1581 = vrot.slane %v1542, %v1580
    %v1583 = vadd.f32 %v1575, %v1581
    %v1584 = vadd.f32 %v1576, %v1581
    %s1585 = scalar_lea.vmem %s10, 16
    %v1586 = vld [vmem:[%s1585] sm:$0xf]
    %v1587 = vld [vmem:[%s1585 + $0x4] sm:$0xf]
    %v1588 = vld [vmem:[%s1585 + $0x8] sm:$0xf]
    %v1589 = vld [vmem:[%s1585 + $0xc] sm:$0xf]
    %s1590 = scalar_lea.vmem %s11, 1
    %v1591 = vld [vmem:[%s1590] sm:$0x1]
    %v1592 = vpack.c.bf16 %v1584, %v1583
    %v1594 = vlaneseq
    %v1595 = vshrl.u32 %v1594, 7
    %v1596 = vsub.s32 0, %v1595
    %v1597 = vrot.slane %v1591, %v1596
    %v1603 = vunpack.c.l.b16 %v1586
    %v1604 = vunpack.c.l.b16 %v1587
    %v1605 = vunpack.c.l.b16 %v1588
    %v1606 = vunpack.c.l.b16 %v1589
    %v1607 = vpack.c.b16 %v1604, %v1603
    %v1608 = vpack.c.b16 %v1606, %v1605
    %v1612 = vsel %vm83, %v1592, 0
    %1614 = vmatprep.subr.bf16.mxu0 0
    %1615 = vmatpush1.bf16.msra.mxu0 %v1607
    %1616 = vmatprep.subr.bf16.mxu0 0
    %1617 = vmatpush1.bf16.msra.mxu0 %v1608
    %1618 = vmatprep.subr.bf16.mxu0 0
    %1619 = vmatpush1.bf16.msra.mxu0 0
    %1620 = vmatprep.subr.bf16.mxu0 0
    %1621 = vmatpush1.bf16.msra.mxu0 0
    %1622 = vmatprep.subr.bf16.mxu0 0
    %1623 = vmatpush1.bf16.msra.mxu0 0
    %1624 = vmatprep.subr.bf16.mxu0 0
    %1625 = vmatpush1.bf16.msra.mxu0 0
    %1626 = vmatprep.subr.bf16.mxu0 0
    %1627 = vmatpush1.bf16.msra.mxu0 0
    %1628 = vmatprep.subr.bf16.mxu0 0
    %1629 = vmatpush1.bf16.msra.mxu0 0
    %1630 = vmatprep.subr.bf16.mxu0 0
    %1631 = vmatpush1.bf16.msra.mxu0 0
    %1632 = vmatprep.subr.bf16.mxu0 0
    %1633 = vmatpush1.bf16.msra.mxu0 0
    %1634 = vmatprep.subr.bf16.mxu0 0
    %1635 = vmatpush1.bf16.msra.mxu0 0
    %1636 = vmatprep.subr.bf16.mxu0 0
    %1637 = vmatpush1.bf16.msra.mxu0 0
    %1638 = vmatprep.subr.bf16.mxu0 0
    %1639 = vmatpush1.bf16.msra.mxu0 0
    %1640 = vmatprep.subr.bf16.mxu0 0
    %1641 = vmatpush1.bf16.msra.mxu0 0
    %1642 = vmatprep.subr.bf16.mxu0 0
    %1643 = vmatpush1.bf16.msra.mxu0 0
    %1644 = vmatprep.subr.bf16.mxu0 0
    %1645 = vmatpush1.bf16.msra.mxu0 0
    %1646 = vmatprep.mubr.bf16.mxu0 0
    %1647 = vmatmul.mubr.bf16.gmra.mrb[0].mxu0 %v1612
    %v1648 = vpop.f32.mrb[0].mxu0
    %v1649 = vadd.f32 %v1597, %v1648
    %v1650 = vpop.f32.mrb[0].mxu0
    %v1651 = vpop.f32.mrb[0].mxu0
    %v1652 = vadd.f32 %v1597, %v1651
    %v1653 = vpop.f32.mrb[0].mxu0
    %1654 = vdwg.mxu0
    %v1655 = vmul.f32 %v1649, 0.5
    %v1656 = vmul.f32 %v1652, 0.5
    %v1657 = vmul.f32 %v1649, 0.044715
    %v1658 = vmul.f32 %v1652, 0.044715
    %v1659 = vmul.f32 %v1657, %v1649
    %v1660 = vmul.f32 %v1658, %v1652
    %v1661 = vmul.f32 %v1659, %v1649
    %v1662 = vmul.f32 %v1660, %v1652
    %v1663 = vadd.f32 %v1649, %v1661
    %v1664 = vadd.f32 %v1652, %v1662
    %v1665 = vmul.f32 %v1663, 0.7978846
    %v1666 = vmul.f32 %v1664, 0.7978846
    %v1667 = vtanh.pop %v1665
    %v1668 = vtanh.pop %v1666
    %v1669 = vadd.f32 %v1667, 1.0
    %v1670 = vadd.f32 %v1668, 1.0
    %v1671 = vmul.f32 %v1655, %v1669
    %v1672 = vmul.f32 %v1656, %v1670
    %s1673 = scalar_lea.vmem %s12, 64
    %v1674 = vld [vmem:[%s1673] sm:$0xf]
    %v1675 = vld [vmem:[%s1673 + $0x4] sm:$0xf]
    %v1676 = vld [vmem:[%s1673 + $0x8] sm:$0xf]
    %v1677 = vld [vmem:[%s1673 + $0xc] sm:$0xf]
    %v1678 = vld [vmem:[%s1673 + $0x10] sm:$0xf]
    %v1679 = vld [vmem:[%s1673 + $0x14] sm:$0xf]
    %v1680 = vld [vmem:[%s1673 + $0x18] sm:$0xf]
    %v1681 = vld [vmem:[%s1673 + $0x1c] sm:$0xf]
    %v1682 = vld [vmem:[%s1673 + $0x20] sm:$0xf]
    %v1683 = vld [vmem:[%s1673 + $0x24] sm:$0xf]
    %v1684 = vld [vmem:[%s1673 + $0x28] sm:$0xf]
    %v1685 = vld [vmem:[%s1673 + $0x2c] sm:$0xf]
    %v1686 = vld [vmem:[%s1673 + $0x30] sm:$0xf]
    %v1687 = vld [vmem:[%s1673 + $0x34] sm:$0xf]
    %v1688 = vld [vmem:[%s1673 + $0x38] sm:$0xf]
    %v1689 = vld [vmem:[%s1673 + $0x3c] sm:$0xf]
    %s1690 = scalar_lea.vmem %s13, 1
    %v1691 = vld [vmem:[%s1690] sm:$0x1]
    %v1692 = vpack.c.bf16 %v1672, %v1671
    %v1694 = vlaneseq
    %v1695 = vshrl.u32 %v1694, 7
    %v1696 = vsub.s32 0, %v1695
    %v1697 = vrot.slane %v1691, %v1696
    %v1715 = vunpack.c.l.b16 %v1674
    %v1716 = vunpack.c.l.b16 %v1675
    %v1717 = vunpack.c.l.b16 %v1676
    %v1718 = vunpack.c.l.b16 %v1677
    %v1719 = vunpack.c.l.b16 %v1678
    %v1720 = vunpack.c.l.b16 %v1679
    %v1721 = vunpack.c.l.b16 %v1680
    %v1722 = vunpack.c.l.b16 %v1681
    %v1723 = vunpack.c.l.b16 %v1682
    %v1724 = vunpack.c.l.b16 %v1683
    %v1725 = vunpack.c.l.b16 %v1684
    %v1726 = vunpack.c.l.b16 %v1685
    %v1727 = vunpack.c.l.b16 %v1686
    %v1728 = vunpack.c.l.b16 %v1687
    %v1729 = vunpack.c.l.b16 %v1688
    %v1730 = vunpack.c.l.b16 %v1689
    %v1731 = vpack.c.b16 %v1716, %v1715
    %v1732 = vpack.c.b16 %v1718, %v1717
    %v1733 = vpack.c.b16 %v1720, %v1719
    %v1734 = vpack.c.b16 %v1722, %v1721
    %v1735 = vpack.c.b16 %v1724, %v1723
    %v1736 = vpack.c.b16 %v1726, %v1725
    %v1737 = vpack.c.b16 %v1728, %v1727
    %v1738 = vpack.c.b16 %v1730, %v1729
    %1747 = vmatprep.subr.bf16.mxu0 0
    %1748 = vmatpush1.bf16.msra.mxu0 %v1731
    %1749 = vmatprep.subr.bf16.mxu0 0
    %1750 = vmatpush1.bf16.msra.mxu0 %v1732
    %1751 = vmatprep.subr.bf16.mxu0 0
    %1752 = vmatpush1.bf16.msra.mxu0 %v1733
    %1753 = vmatprep.subr.bf16.mxu0 0
    %1754 = vmatpush1.bf16.msra.mxu0 %v1734
    %1755 = vmatprep.subr.bf16.mxu0 0
    %1756 = vmatpush1.bf16.msra.mxu0 %v1735
    %1757 = vmatprep.subr.bf16.mxu0 0
    %1758 = vmatpush1.bf16.msra.mxu0 %v1736
    %1759 = vmatprep.subr.bf16.mxu0 0
    %1760 = vmatpush1.bf16.msra.mxu0 %v1737
    %1761 = vmatprep.subr.bf16.mxu0 0
    %1762 = vmatpush1.bf16.msra.mxu0 %v1738
    %1763 = vmatprep.subr.bf16.mxu0 0
    %1764 = vmatpush1.bf16.msra.mxu0 0
    %1765 = vmatprep.subr.bf16.mxu0 0
    %1766 = vmatpush1.bf16.msra.mxu0 0
    %1767 = vmatprep.subr.bf16.mxu0 0
    %1768 = vmatpush1.bf16.msra.mxu0 0
    %1769 = vmatprep.subr.bf16.mxu0 0
    %1770 = vmatpush1.bf16.msra.mxu0 0
    %1771 = vmatprep.subr.bf16.mxu0 0
    %1772 = vmatpush1.bf16.msra.mxu0 0
    %1773 = vmatprep.subr.bf16.mxu0 0
    %1774 = vmatpush1.bf16.msra.mxu0 0
    %1775 = vmatprep.subr.bf16.mxu0 0
    %1776 = vmatpush1.bf16.msra.mxu0 0
    %1777 = vmatprep.subr.bf16.mxu0 0
    %1778 = vmatpush1.bf16.msra.mxu0 0
    %1779 = vmatprep.mubr.bf16.mxu0 0
    %1780 = vmatmul.mubr.bf16.gmra.mrb[0].mxu0 %v1692
    %v1781 = vpop.f32.mrb[0].mxu0
    %v1782 = vadd.f32 %v1697, %v1781
    %v1783 = vpop.f32.mrb[0].mxu0
    %v1784 = vpop.f32.mrb[0].mxu0
    %v1785 = vadd.f32 %v1697, %v1784
    %v1786 = vpop.f32.mrb[0].mxu0
    %1787 = vdwg.mxu0
    %v1788 = vadd.f32 %v1583, %v1782
    %v1789 = vadd.f32 %v1584, %v1785
    %s1790 = scalar_lea.vmem %s14, 1
    %v1791 = vld [vmem:[%s1790] sm:$0x1]
    %s1792 = scalar_lea.vmem %s15, 1
    %v1793 = vld [vmem:[%s1792] sm:$0x1]
    %v1794 = vsel %vm83, %v1788, 0.0
    %1795 = vadd.xlane.f32.xlu0 %v1794
    %v1796 = vpop.xlane.xlu0 %1795
    %v1797 = vsel %vm83, %v1789, 0.0
    %1798 = vadd.xlane.f32.xlu0 %v1797
    %v1799 = vpop.xlane.xlu0 %1798
    %v1800 = vmul.f32 %v1796, %v90
    %v1801 = vmul.f32 %v1799, %v90
    %v1802 = vsub.f32 %v1788, %v1800
    %v1803 = vsub.f32 %v1789, %v1801
    %v1804 = vmul.f32 %v1802, %v1802
    %v1805 = vmul.f32 %v1803, %v1803
    %v1806 = vsel %vm83, %v1804, 0.0
    %1807 = vadd.xlane.f32.xlu0 %v1806
    %v1808 = vpop.xlane.xlu0 %1807
    %v1809 = vsel %vm83, %v1805, 0.0
    %1810 = vadd.xlane.f32.xlu0 %v1809
    %v1811 = vpop.xlane.xlu0 %1810
    %v1812 = vmul.f32 %v1808, %v90
    %v1813 = vmul.f32 %v1811, %v90
    %v1814 = vadd.f32 %v1812, 1e-12
    %v1815 = vadd.f32 %v1813, 1e-12
    %v1816 = vrsqrt.pop %v1814
    %v1817 = vrsqrt.pop %v1815
    %v1818 = vmul.f32 %v1802, %v1816
    %v1819 = vmul.f32 %v1803, %v1817
    %v1821 = vlaneseq
    %v1822 = vshrl.u32 %v1821, 7
    %v1823 = vsub.s32 0, %v1822
    %v1824 = vrot.slane %v1791, %v1823
    %v1826 = vmul.f32 %v1818, %v1824
    %v1827 = vmul.f32 %v1819, %v1824
    %v1829 = vlaneseq
    %v1830 = vshrl.u32 %v1829, 7
    %v1831 = vsub.s32 0, %v1830
    %v1832 = vrot.slane %v1793, %v1831
    %v1834 = vadd.f32 %v1826, %v1832
    %v1835 = vadd.f32 %v1827, %v1832
    %v1836 = vld [vmem:[%s16] sm:$0xf]
    %v1837 = vld [vmem:[%s16 + $0x4] sm:$0xf]
    %v1838 = vld [vmem:[%s16 + $0x8] sm:$0xf]
    %v1839 = vld [vmem:[%s16 + $0xc] sm:$0xf]
    %v1840 = vld [vmem:[%s17] sm:$0x1]
    %v1841 = vpack.c.bf16 %v1834, %v1834
    %v1842 = vpack.c.bf16 %v1835, %v1835
    %v1844 = vlaneseq
    %v1845 = vshrl.u32 %v1844, 7
    %v1846 = vsub.s32 0, %v1845
    %v1847 = vrot.slane %v1840, %v1846
    %v1851 = vunpack.c.l.b16 %v1841
    %v1852 = vunpack.c.l.b16 %v1842
    %v1853 = vrot.slane %v1852, 7
    %vm1854 = vcmask 1041409
    %v1855 = vsel %vm1854, %v1853, %v1851
    %v1856 = vpack.c.b16 %v1855, %v1855
    %v1861 = vunpack.c.l.b16 %v1836
    %v1862 = vunpack.c.l.b16 %v1837
    %v1863 = vunpack.c.l.b16 %v1838
    %v1864 = vunpack.c.l.b16 %v1839
    %v1865 = vpack.c.b16 %v1862, %v1861
    %v1866 = vpack.c.b16 %v1864, %v1863
    %v1870 = vsel %vm83, %v1856, 0
    %1872 = vmatprep.subr.bf16.mxu0 0
    %1873 = vmatpush1.bf16.msra.mxu0 %v1865
    %1874 = vmatprep.subr.bf16.mxu0 0
    %1875 = vmatpush1.bf16.msra.mxu0 %v1866
    %1876 = vmatprep.subr.bf16.mxu0 0
    %1877 = vmatpush1.bf16.msra.mxu0 0
    %1878 = vmatprep.subr.bf16.mxu0 0
    %1879 = vmatpush1.bf16.msra.mxu0 0
    %1880 = vmatprep.subr.bf16.mxu0 0
    %1881 = vmatpush1.bf16.msra.mxu0 0
    %1882 = vmatprep.subr.bf16.mxu0 0
    %1883 = vmatpush1.bf16.msra.mxu0 0
    %1884 = vmatprep.subr.bf16.mxu0 0
    %1885 = vmatpush1.bf16.msra.mxu0 0
    %1886 = vmatprep.subr.bf16.mxu0 0
    %1887 = vmatpush1.bf16.msra.mxu0 0
    %1888 = vmatprep.subr.bf16.mxu0 0
    %1889 = vmatpush1.bf16.msra.mxu0 0
    %1890 = vmatprep.subr.bf16.mxu0 0
    %1891 = vmatpush1.bf16.msra.mxu0 0
    %1892 = vmatprep.subr.bf16.mxu0 0
    %1893 = vmatpush1.bf16.msra.mxu0 0
    %1894 = vmatprep.subr.bf16.mxu0 0
    %1895 = vmatpush1.bf16.msra.mxu0 0
    %1896 = vmatprep.subr.bf16.mxu0 0
    %1897 = vmatpush1.bf16.msra.mxu0 0
    %1898 = vmatprep.subr.bf16.mxu0 0
    %1899 = vmatpush1.bf16.msra.mxu0 0
    %1900 = vmatprep.subr.bf16.mxu0 0
    %1901 = vmatpush1.bf16.msra.mxu0 0
    %1902 = vmatprep.subr.bf16.mxu0 0
    %1903 = vmatpush1.bf16.msra.mxu0 0
    %1904 = vmatprep.mubr.bf16.mxu0 0
    %1905 = vmatmul.mubr.bf16.gmra.mrb[0].mxu0 %v1870
    %v1906 = vpop.f32.mrb[0].mxu0
    %v1907 = vadd.f32 %v1847, %v1906
    %v1908 = vpop.f32.mrb[0].mxu0
    %v1909 = vpop.f32.mrb[0].mxu0
    %v1910 = vpop.f32.mrb[0].mxu0
    %1911 = vdwg.mxu0
    %v1912 = vtanh.pop %v1907
    %v1913 = vld [vmem:[%s18] sm:$0xf]
    %v1914 = vld [vmem:[%s18 + $0x4] sm:$0xf]
    %v1915 = vld [vmem:[%s18 + $0x8] sm:$0xf]
    %v1916 = vld [vmem:[%s18 + $0xc] sm:$0xf]
    %v1917 = vld [vmem:[%s19] sm:$0x1]
    %v1918 = vpack.c.bf16 %v1912, %v1912
    %v1920 = vlaneseq
    %v1921 = vshrl.u32 %v1920, 7
    %v1922 = vsub.s32 0, %v1921
    %v1923 = vrot.slane %v1917, %v1922
    %v1929 = vunpack.c.l.b16 %v1913
    %v1930 = vunpack.c.l.b16 %v1914
    %v1931 = vunpack.c.l.b16 %v1915
    %v1932 = vunpack.c.l.b16 %v1916
    %v1933 = vpack.c.b16 %v1930, %v1929
    %v1934 = vpack.c.b16 %v1932, %v1931
    %v1938 = vsel %vm83, %v1918, 0
    %1940 = vmatprep.subr.bf16.mxu0 0
    %1941 = vmatpush1.bf16.msra.mxu0 %v1933
    %1942 = vmatprep.subr.bf16.mxu0 0
    %1943 = vmatpush1.bf16.msra.mxu0 %v1934
    %1944 = vmatprep.subr.bf16.mxu0 0
    %1945 = vmatpush1.bf16.msra.mxu0 0
    %1946 = vmatprep.subr.bf16.mxu0 0
    %1947 = vmatpush1.bf16.msra.mxu0 0
    %1948 = vmatprep.subr.bf16.mxu0 0
    %1949 = vmatpush1.bf16.msra.mxu0 0
    %1950 = vmatprep.subr.bf16.mxu0 0
    %1951 = vmatpush1.bf16.msra.mxu0 0
    %1952 = vmatprep.subr.bf16.mxu0 0
    %1953 = vmatpush1.bf16.msra.mxu0 0
    %1954 = vmatprep.subr.bf16.mxu0 0
    %1955 = vmatpush1.bf16.msra.mxu0 0
    %1956 = vmatprep.subr.bf16.mxu0 0
    %1957 = vmatpush1.bf16.msra.mxu0 0
    %1958 = vmatprep.subr.bf16.mxu0 0
    %1959 = vmatpush1.bf16.msra.mxu0 0
    %1960 = vmatprep.subr.bf16.mxu0 0
    %1961 = vmatpush1.bf16.msra.mxu0 0
    %1962 = vmatprep.subr.bf16.mxu0 0
    %1963 = vmatpush1.bf16.msra.mxu0 0
    %1964 = vmatprep.subr.bf16.mxu0 0
    %1965 = vmatpush1.bf16.msra.mxu0 0
    %1966 = vmatprep.subr.bf16.mxu0 0
    %1967 = vmatpush1.bf16.msra.mxu0 0
    %1968 = vmatprep.subr.bf16.mxu0 0
    %1969 = vmatpush1.bf16.msra.mxu0 0
    %1970 = vmatprep.subr.bf16.mxu0 0
    %1971 = vmatpush1.bf16.msra.mxu0 0
    %1972 = vmatprep.mubr.bf16.mxu0 0
    %1973 = vmatmul.mubr.bf16.gmra.mrb[0].mxu0 %v1938
    %v1974 = vpop.f32.mrb[0].mxu0
    %v1975 = vadd.f32 %v1923, %v1974
    %v1976 = vpop.f32.mrb[0].mxu0
    %v1977 = vpop.f32.mrb[0].mxu0
    %v1978 = vpop.f32.mrb[0].mxu0
    %1979 = vdwg.mxu0
    %1980 = vst [vmem:[#allocation5] sm:$0x3] %v1975
    // Predicated region
    $region86: #{tpu_custom_call.1} parent=1 // pred_check
      _
    $region87: #{tpu_custom_call.1} parent=1 // pred_check_branch
      %1982 = sbr.rel (0) target = $region89
    $region88: #{tpu_custom_call.1} parent=1 // pred_region
      %s1984 = ssub.s32 32, 32
      %1985 = vsyncadd [#allocation4], %s1984
      %s1987 = sshll.u32 [#allocation5], 4
      %s1988 = int_to_ptr.vmem [resolvable:$true] %s1987
      %1990 = dma.vmem_to_hbm [thread:$0]  %s1988, 32, %s20, [#allocation4]
    $region89: #{tpu_custom_call.1} parent=1 // pred_fallthru
      _
    // Predicated region
    $region90: #{tpu_custom_call.1} parent=1 // pred_check
      _
    $region91: #{tpu_custom_call.1} parent=1 // pred_check_branch
      %1992 = sbr.rel (0) target = $region93
    $region92: #{tpu_custom_call.1} parent=1 // pred_region
      %1993 = dma.done [#allocation4], 32
    $region93: #{tpu_custom_call.1} parent=1 // pred_fallthru
      _
    %1994 = vsyncpa [#allocation3], 1
    %1995 = vsyncpa [#allocation4], 1

</llo_original>
